<compile_context>
chip_gen: v7x
topology: tpu7x:2x2x1
jax: 0.10.0
libtpu: 0.0.40
codegen_flags: <defaults>
</compile_context>

<pallas_src>
import math

import jax
import jax.numpy as jnp
from jax.experimental import pallas as pl
from jax.experimental.pallas import tpu as pltpu


# ----------------------------- static helpers (Python) -----------------------------
def radius(ndim):
    if ndim < 1:
        raise ValueError("The dimension should be more than or equal 1.")
    ndim = int(ndim)
    if ndim == 1:
        return 0.0
    elif ndim == 2:
        return 0.5
    else:
        return 0.5 / math.sqrt(1.0 - radius(ndim - 1) ** 2)


def costheta(ndim):
    if ndim < 2:
        raise ValueError("The dimension should be more than or equal to 2.")
    return 2.0 * radius(ndim - 1) ** 2 - 1.0


def _round_up(a, m):
    return ((a + m - 1) // m) * m


# ----------------------------- Pallas kernel -----------------------------
def _make_angel_loss_kernel(costheta_val, cen_w, ang_w, batch_size, num_classes,
                            c_pad, d_pad, block_b, centers_dtype):
    costheta_val = float(costheta_val)
    cen_w = float(cen_w)
    ang_w = float(ang_w)
    inv_batch = 1.0 / float(batch_size)
    C = int(num_classes)
    ang_denom = 1.0 / (0.5 * C * (C - 1))
    c_pad = int(c_pad)
    d_pad = int(d_pad)
    block_b = int(block_b)

    def kernel(y_ref, feat_ref, centers_t_hbm, centers_hbm, out_ref,
               cvm, dma_sem, acc_sel, acc_fsq, ang, sqn):
        c = pl.program_id(0)   # core-split axis ("parallel")
        i = pl.program_id(1)   # batch-tile axis ("arbitrary", accumulated)

        # ---- once per core: DMA resident centers^T (single-buffered), init accumulators ----
        @pl.when(i == 0)
        def _init():
            cp = pltpu.make_async_copy(centers_t_hbm, cvm, dma_sem.at[0])
            cp.start()
            cp.wait()
            ct32 = cvm[...].astype(jnp.float32)                       # (D_pad, C_pad)
            sqn[...] = jnp.sum(ct32 * ct32, axis=0, keepdims=True)    # ||c_k||^2, exact
            acc_sel[...] = jnp.zeros_like(acc_sel)
            acc_fsq[...] = jnp.zeros_like(acc_fsq)
            ang[...] = jnp.zeros_like(ang)

        # ---- once per call (core 0 only): angular center-separation loss ----
        @pl.when(jnp.logical_and(i == 0, c == 0))
        def _angular():
            def body(cbuf, sem):
                cp = pltpu.make_async_copy(centers_hbm, cbuf, sem.at[0])
                cp.start()
                cp.wait()
                c32 = cbuf[...].astype(jnp.float32)                   # (C_pad, D_pad)
                sq = jnp.sum(c32 * c32, axis=1, keepdims=True)        # (C_pad, 1)
                vrow = jax.lax.broadcasted_iota(jnp.int32, (c_pad, 1), 0) < C
                inv = jax.lax.rsqrt(jnp.where(vrow, sq, 1.0))         # EUP; padded rows guarded
                # Row-normalize, keep MXU operands in the native (e.g. bf16) dtype.
                cn = (c32 * inv).astype(cbuf.dtype)
                cos = jnp.einsum("id,jd->ij", cn, cn,
                                 preferred_element_type=jnp.float32)  # (C_pad, C_pad)
                row = jax.lax.broadcasted_iota(jnp.int32, (c_pad, c_pad), 0)
                col = jax.lax.broadcasted_iota(jnp.int32, (c_pad, c_pad), 1)
                mask = jnp.logical_and(row != col,
                                       jnp.logical_and(row < C, col < C))
                err = jnp.where(mask, cos - costheta_val, 0.0)
                ang[...] = jnp.sum(err * err, keepdims=True) * ang_denom

            # Transient allocation: the (C_pad,D_pad) slab + (C_pad,C_pad) temps
            # only live during this one-time block (region-stack, not full-lifetime).
            pl.run_scoped(body,
                          pltpu.VMEM((c_pad, d_pad), centers_dtype),
                          pltpu.SemaphoreType.DMA((1,)))

        # ---- per batch tile: center-loss partial sums (no cross-lane reduces) ----
        feat = feat_ref[...]                                          # (tb, D_pad) native dtype
        y = y_ref[...]                                                # (tb, 1) int32
        # Plain NN matmul on the MXU: feat @ centers^T-resident (D_pad, C_pad).
        logits = jnp.dot(feat, cvm[...], preferred_element_type=jnp.float32)   # (tb, C_pad)
        cls = jax.lax.broadcasted_iota(jnp.int32, (block_b, c_pad), 1)
        onehot = cls == y                                             # padded rows (y==C) hit a zero class
        # Fused selection:  ||c_y||^2 - 2 f.c_y   (one select + one sublane reduce)
        sel = jnp.where(onehot, sqn[...] - 2.0 * logits, 0.0)
        acc_sel[...] += jnp.sum(sel, axis=0, keepdims=True)           # (1, C_pad)
        f32 = feat.astype(jnp.float32)
        acc_fsq[...] += jnp.sum(f32 * f32, axis=0, keepdims=True)     # (1, D_pad)

        # ---- finalize per core: single cross-lane reduce + aligned (1,8,128) store ----
        @pl.when(i == pl.num_programs(1) - 1)
        def _finalize():
            cen_sum = (jnp.sum(acc_fsq[...], keepdims=True)
                       + jnp.sum(acc_sel[...], keepdims=True))        # (1, 1)
            total = (cen_w * 0.5 * inv_batch) * cen_sum + ang_w * ang[...]
            r = jax.lax.broadcasted_iota(jnp.int32, (1, 8, 128), 1)
            l = jax.lax.broadcasted_iota(jnp.int32, (1, 8, 128), 2)
            out_ref[...] = jnp.where(jnp.logical_and(r == 0, l == 0),
                                     total.reshape(1, 1, 1), 0.0)

    return kernel


def angel_loss(y, feat, centers, *, cenloss_weight=1.0, angloss_weight=1.0,
               block_b=None, core_splits=2):
    """Pallas implementation of AngelLoss.forward (all three weight branches)."""
    num_classes, feat_dim = centers.shape
    batch = feat.shape[0]
    if feat.shape[1] != feat_dim:
        raise ValueError(
            "Center's dim: {0} should be equal to input feature's dim: {1}".format(
                feat_dim, feat.shape[1]))
    ct = costheta(num_classes)

    # Reproduce the PyTorch module's weight branching exactly (including the
    # cenloss_weight==0 branch that DIVIDES by angloss_weight).
    if angloss_weight == 0:
        cen_w, ang_w = float(cenloss_weight), 0.0
    elif cenloss_weight == 0:
        cen_w, ang_w = 0.0, 1.0 / float(angloss_weight)
    else:
        cen_w, ang_w = float(cenloss_weight), float(angloss_weight)

    core_splits = max(1, int(core_splits))
    c_pad = _round_up(num_classes, 128)   # lane-dense logits / norms / gram
    d_pad = _round_up(feat_dim, 8)        # sublane-aligned centers_t

    isz = jnp.dtype(feat.dtype).itemsize
    csz = jnp.dtype(centers.dtype).itemsize

    # Batch tile: large multiple of 128 that fits the steady-state VMEM budget.
    if block_b is None:
        bytes_per_row = 2 * d_pad * isz + 4 * c_pad * 4 + 2 * 128 * 4
        bb = (24 << 20) // max(1, bytes_per_row)
        bb = max(128, min(int(bb), 2048))
        block_b = (bb // 128) * 128
    block_b = max(8, (int(block_b) // 8) * 8)
    per_core_rows = -(-batch // core_splits)
    block_b = min(block_b, _round_up(per_core_rows, 8))

    b_pad = _round_up(batch, core_splits * block_b)
    tiles = b_pad // (core_splits * block_b)

    # Pad inputs: zero feat rows + out-of-range label (-> zero-padded class) and
    # zero-padded classes/feature columns contribute exactly zero to the loss.
    y2d = y.astype(jnp.int32).reshape(-1, 1)
    y2d = jnp.pad(y2d, ((0, b_pad - batch), (0, 0)), constant_values=num_classes)
    feat_p = jnp.pad(feat, ((0, b_pad - batch), (0, d_pad - feat_dim)))
    centers_p = jnp.pad(centers, ((0, c_pad - num_classes), (0, d_pad - feat_dim)))
    centers_t_p = jnp.transpose(centers_p)        # (D_pad, C_pad), transposed once in XLA

    # Explicit VMEM budget (default scoped limit is 16/32 MiB; cap at v7x's 64 MiB).
    steady = (d_pad * c_pad * csz                 # resident centers_t (single buffer)
              + 2 * block_b * d_pad * isz         # feat double buffer
              + 2 * block_b * 128 * 4             # y double buffer (lane padded)
              + 2 * 8 * 128 * 4                   # out block
              + 4 * block_b * c_pad * 4           # logits / onehot / sel temps
              + 8 * (2 * c_pad + d_pad + 128) * 4)  # accumulators (sublane padded)
    peak_ang = c_pad * d_pad * (2 * csz + 4) + 3 * c_pad * c_pad * 4
    vmem_limit = int(min(64 << 20, max(16 << 20, 2 * (steady + peak_ang) + (8 << 20))))

    kernel = _make_angel_loss_kernel(ct, cen_w, ang_w, batch, num_classes,
                                     c_pad, d_pad, block_b, centers.dtype)

    out = pl.pallas_call(
        kernel,
        out_shape=jax.ShapeDtypeStruct((core_splits, 8, 128), jnp.float32),
        grid_spec=pltpu.PrefetchScalarGridSpec(
            num_scalar_prefetch=0,
            grid=(core_splits, tiles),
            in_specs=[
                pl.BlockSpec((block_b, 1), lambda c, i: (c * tiles + i, 0)),
                pl.BlockSpec((block_b, d_pad), lambda c, i: (c * tiles + i, 0)),
                # centers^T / centers stay in HBM; DMA'd manually (single VMEM copy).
                pl.BlockSpec(memory_space=pl.ANY),
                pl.BlockSpec(memory_space=pl.ANY),
            ],
            out_specs=pl.BlockSpec((1, 8, 128), lambda c, i: (c, 0, 0)),
            scratch_shapes=[
                pltpu.VMEM((d_pad, c_pad), centers.dtype),   # resident centers_t
                pltpu.SemaphoreType.DMA((1,)),               # centers_t copy sem
                pltpu.VMEM((1, c_pad), jnp.float32),         # acc_sel lane partials
                pltpu.VMEM((1, d_pad), jnp.float32),         # acc_fsq lane partials
                pltpu.VMEM((1, 1), jnp.float32),             # angular loss
                pltpu.VMEM((1, c_pad), jnp.float32),         # ||c_k||^2 row
            ],
        ),
        compiler_params=pltpu.CompilerParams(
            dimension_semantics=("parallel", "arbitrary"),
            vmem_limit_bytes=vmem_limit,
        ),
    )(y2d, feat_p, centers_t_p, centers_p)
    # Each core writes its partial (angular included only on core 0) at [c,0,0].
    return jnp.sum(out)


# ----------------------------- reference (plain JAX) -----------------------------
def angel_loss_ref(y, feat, centers, *, cenloss_weight=1.0, angloss_weight=1.0):
    num_classes = centers.shape[0]
    ct = costheta(num_classes)
    B = feat.shape[0]
    centers_pred = centers[y.astype(jnp.int32)]
    diff = feat - centers_pred
    loss_cen = 0.5 * jnp.sum(diff ** 2) / B
    dist = jnp.linalg.norm(centers, axis=1)
    gram = centers @ centers.T
    cos = gram / (dist[:, None] * dist[None, :])
    mask = 1.0 - jnp.eye(num_classes)
    loss_ang = jnp.sum(mask * (cos - ct) ** 2) / (0.5 * num_classes * (num_classes - 1))
    return cenloss_weight * loss_cen + angloss_weight * loss_ang


# ----------------------------- demo -----------------------------
if __name__ == "__main__":
    num_classes = 10
    feat_dim = 64
    batch = 200   # not a multiple of the tile -> exercises padding + multi-step grid

    key = jax.random.PRNGKey(0)
    k_centers, k_feat, k_y = jax.random.split(key, 3)

    centers = jax.random.normal(k_centers, (num_classes, feat_dim), dtype=jnp.float32)
    feat = jax.random.normal(k_feat, (batch, feat_dim), dtype=jnp.float32)
    y = jax.random.randint(k_y, (batch,), 0, num_classes, dtype=jnp.int32)

    ref = angel_loss_ref(y, feat, centers, cenloss_weight=1.0, angloss_weight=1.0)

    # Multi-tile-per-core path (exercises init / accumulate / finalize + padding).
    loss1 = angel_loss(y, feat, centers, cenloss_weight=1.0, angloss_weight=1.0,
                       block_b=64)
    loss1 = jax.block_until_ready(loss1)
    assert jnp.allclose(loss1, ref, rtol=1e-3, atol=1e-3), (loss1, ref)

    # Auto tile size (single tile per core).
    loss2 = angel_loss(y, feat, centers, cenloss_weight=1.0, angloss_weight=1.0)
    loss2 = jax.block_until_ready(loss2)
    assert jnp.allclose(loss2, ref, rtol=1e-3, atol=1e-3), (loss2, ref)

    print("KERNEL_OK")
</pallas_src>

<mosaic_0001>
module attributes {stable_mosaic.version = 11 : i64} {
  func.func @kernel(%arg0: i32, %arg1: i32, %arg2: memref<64x1xi32, #tpu.memory_space<vmem>>, %arg3: memref<64x64xf32, #tpu.memory_space<vmem>>, %arg4: memref<64x128xf32, #tpu.memory_space<any>>, %arg5: memref<128x64xf32, #tpu.memory_space<any>>, %arg6: memref<1x8x128xf32, #tpu.memory_space<vmem>>, %arg7: memref<64x128xf32, #tpu.memory_space<vmem>>, %arg8: memref<1x!tpu.dma_semaphore, #tpu.memory_space<semaphore_mem>>, %arg9: memref<1x128xf32, #tpu.memory_space<vmem>>, %arg10: memref<1x64xf32, #tpu.memory_space<vmem>>, %arg11: memref<1x1xf32, #tpu.memory_space<vmem>>, %arg12: memref<1x128xf32, #tpu.memory_space<vmem>>) attributes {dimension_semantics = [#tpu.dimension_semantics<parallel>, #tpu.dimension_semantics<arbitrary>], iteration_bounds = array<i64: 2, 2>, scalar_prefetch = 0 : i64, scratch_operands = 6 : i64, tpu.core_type = #tpu.core_type<tc>, window_params = [{transform_indices = @transform_0, window_bounds = array<i64: 64, 1>}, {transform_indices = @transform_1, window_bounds = array<i64: 64, 64>}, {}, {}, {transform_indices = @transform_4, window_bounds = array<i64: 1, 8, 128>}]} {
    %c0_i32 = arith.constant 0 : i32
    %0 = arith.cmpi eq, %arg1, %c0_i32 : i32
    %1 = arith.extui %0 : i1 to i32
    %c0_i32_0 = arith.constant 0 : i32
    %2 = arith.cmpi ne, %1, %c0_i32_0 : i32
    scf.if %2 {
      %c0_i32_24 = arith.constant 0 : i32
      %36 = tpu.memref_slice %arg8[%c0_i32_24] : memref<1x!tpu.dma_semaphore, #tpu.memory_space<semaphore_mem>> -> memref<1x!tpu.dma_semaphore, #tpu.memory_space<semaphore_mem>>
      %37 = tpu.memref_squeeze %36 : memref<1x!tpu.dma_semaphore, #tpu.memory_space<semaphore_mem>> -> memref<!tpu.dma_semaphore, #tpu.memory_space<semaphore_mem>>
      tpu.enqueue_dma source(%arg4 : memref<64x128xf32, #tpu.memory_space<any>>) target(%arg7 : memref<64x128xf32, #tpu.memory_space<vmem>>) target_semaphore(%37 : memref<!tpu.dma_semaphore, #tpu.memory_space<semaphore_mem>>)
      %c0_i32_25 = arith.constant 0 : i32
      %38 = tpu.memref_slice %arg8[%c0_i32_25] : memref<1x!tpu.dma_semaphore, #tpu.memory_space<semaphore_mem>> -> memref<1x!tpu.dma_semaphore, #tpu.memory_space<semaphore_mem>>
      %39 = tpu.memref_squeeze %38 : memref<1x!tpu.dma_semaphore, #tpu.memory_space<semaphore_mem>> -> memref<!tpu.dma_semaphore, #tpu.memory_space<semaphore_mem>>
      tpu.wait_dma2 semaphore(%39 : memref<!tpu.dma_semaphore, #tpu.memory_space<semaphore_mem>>) src(%arg4 : memref<64x128xf32, #tpu.memory_space<any>>) dst(%arg7 : memref<64x128xf32, #tpu.memory_space<vmem>>)
      %c0_26 = arith.constant 0 : index
      %c0_27 = arith.constant 0 : index
      %40 = vector.load %arg7[%c0_26, %c0_27] : memref<64x128xf32, #tpu.memory_space<vmem>>, vector<64x128xf32>
      %41 = arith.mulf %40, %40 : vector<64x128xf32>
      %cst_28 = arith.constant dense<0.000000e+00> : vector<128xf32>
      %42 = vector.multi_reduction <add>, %41, %cst_28 [0] : vector<64x128xf32> to vector<128xf32>
      %43 = vector.shape_cast %42 : vector<128xf32> to vector<1x128xf32>
      %c0_29 = arith.constant 0 : index
      %c0_30 = arith.constant 0 : index
      %44 = vector.load %arg12[%c0_29, %c0_30] : memref<1x128xf32, #tpu.memory_space<vmem>>, vector<1x128xf32>
      tpu.vector_store %arg12[%c0_29, %c0_30], %43 {strides = array<i32>} : memref<1x128xf32, #tpu.memory_space<vmem>>, vector<1x128xf32>,
      %cst_31 = arith.constant 0.000000e+00 : f32
      %45 = vector.broadcast %cst_31 : f32 to vector<1x128xf32>
      %c0_32 = arith.constant 0 : index
      %c0_33 = arith.constant 0 : index
      %46 = vector.load %arg9[%c0_32, %c0_33] : memref<1x128xf32, #tpu.memory_space<vmem>>, vector<1x128xf32>
      tpu.vector_store %arg9[%c0_32, %c0_33], %45 {strides = array<i32>} : memref<1x128xf32, #tpu.memory_space<vmem>>, vector<1x128xf32>,
      %cst_34 = arith.constant 0.000000e+00 : f32
      %47 = vector.broadcast %cst_34 : f32 to vector<1x64xf32>
      %c0_35 = arith.constant 0 : index
      %c0_36 = arith.constant 0 : index
      %48 = vector.load %arg10[%c0_35, %c0_36] : memref<1x64xf32, #tpu.memory_space<vmem>>, vector<1x64xf32>
      tpu.vector_store %arg10[%c0_35, %c0_36], %47 {strides = array<i32>} : memref<1x64xf32, #tpu.memory_space<vmem>>, vector<1x64xf32>,
      %cst_37 = arith.constant 0.000000e+00 : f32
      %49 = vector.broadcast %cst_37 : f32 to vector<1x1xf32>
      %c0_38 = arith.constant 0 : index
      %c0_39 = arith.constant 0 : index
      %50 = vector.load %arg11[%c0_38, %c0_39] : memref<1x1xf32, #tpu.memory_space<vmem>>, vector<1x1xf32>
      tpu.vector_store %arg11[%c0_38, %c0_39], %49 {strides = array<i32>} : memref<1x1xf32, #tpu.memory_space<vmem>>, vector<1x1xf32>,
    } else {
    }
    %c0_i32_1 = arith.constant 0 : i32
    %3 = arith.cmpi eq, %arg1, %c0_i32_1 : i32
    %c0_i32_2 = arith.constant 0 : i32
    %4 = arith.cmpi eq, %arg0, %c0_i32_2 : i32
    %5 = arith.andi %3, %4 : i1
    %6 = arith.extui %5 : i1 to i32
    %c0_i32_3 = arith.constant 0 : i32
    %7 = arith.cmpi ne, %6, %c0_i32_3 : i32
    scf.if %7 {
      "tpu.region"() ({
        %alloca = memref.alloca() : memref<128x64xf32, #tpu.memory_space<vmem>>
        %36 = tpu.sem_alloc : memref<1x!tpu.dma_semaphore, #tpu.memory_space<semaphore_mem>>
        %c0_i32_24 = arith.constant 0 : i32
        %37 = tpu.memref_slice %36[%c0_i32_24] : memref<1x!tpu.dma_semaphore, #tpu.memory_space<semaphore_mem>> -> memref<1x!tpu.dma_semaphore, #tpu.memory_space<semaphore_mem>>
        %38 = tpu.memref_squeeze %37 : memref<1x!tpu.dma_semaphore, #tpu.memory_space<semaphore_mem>> -> memref<!tpu.dma_semaphore, #tpu.memory_space<semaphore_mem>>
        tpu.enqueue_dma source(%arg5 : memref<128x64xf32, #tpu.memory_space<any>>) target(%alloca : memref<128x64xf32, #tpu.memory_space<vmem>>) target_semaphore(%38 : memref<!tpu.dma_semaphore, #tpu.memory_space<semaphore_mem>>)
        %c0_i32_25 = arith.constant 0 : i32
        %39 = tpu.memref_slice %36[%c0_i32_25] : memref<1x!tpu.dma_semaphore, #tpu.memory_space<semaphore_mem>> -> memref<1x!tpu.dma_semaphore, #tpu.memory_space<semaphore_mem>>
        %40 = tpu.memref_squeeze %39 : memref<1x!tpu.dma_semaphore, #tpu.memory_space<semaphore_mem>> -> memref<!tpu.dma_semaphore, #tpu.memory_space<semaphore_mem>>
        tpu.wait_dma2 semaphore(%40 : memref<!tpu.dma_semaphore, #tpu.memory_space<semaphore_mem>>) src(%arg5 : memref<128x64xf32, #tpu.memory_space<any>>) dst(%alloca : memref<128x64xf32, #tpu.memory_space<vmem>>)
        %c0_26 = arith.constant 0 : index
        %c0_27 = arith.constant 0 : index
        %41 = vector.load %alloca[%c0_26, %c0_27] : memref<128x64xf32, #tpu.memory_space<vmem>>, vector<128x64xf32>
        %42 = arith.mulf %41, %41 : vector<128x64xf32>
        %cst_28 = arith.constant dense<0.000000e+00> : vector<128xf32>
        %43 = vector.multi_reduction <add>, %42, %cst_28 [1] : vector<128x64xf32> to vector<128xf32>
        %44 = vector.shape_cast %43 : vector<128xf32> to vector<128x1xf32>
        %45 = tpu.iota {dimensions = array<i32: 0>} : vector<128x1xi32>
        %c10_i32 = arith.constant 10 : i32
        %46 = vector.broadcast %c10_i32 : i32 to vector<128x1xi32>
        %47 = arith.cmpi slt, %45, %46 : vector<128x1xi32>
        %cst_29 = arith.constant 1.000000e+00 : f32
        %48 = vector.broadcast %cst_29 : f32 to vector<128x1xf32>
        %49 = arith.select %47, %44, %48 : vector<128x1xi1>, vector<128x1xf32>
        %50 = math.rsqrt %49 : vector<128x1xf32>
        %51 = vector.broadcast %50 : vector<128x1xf32> to vector<128x64xf32>
        %52 = arith.mulf %41, %51 : vector<128x64xf32>
        "tpu.trace_start"() <{level = 10 : i32, message = "id,jd->ij"}> : () -> ()
        %cst_30 = arith.constant dense<0.000000e+00> : vector<128x128xf32>
        %53 = tpu.matmul %52, %52, %cst_30 {dimension_numbers = #tpu.dot_dimension_numbers<[1], [1], [0], [0], [0, 0, 1, 0], [], []>} : vector<128x64xf32>, vector<128x64xf32>, vector<128x128xf32> -> vector<128x128xf32>
        "tpu.trace_stop"() : () -> ()
        %54 = tpu.iota {dimensions = array<i32: 0>} : vector<128x128xi32>
        %55 = tpu.iota {dimensions = array<i32: 1>} : vector<128x128xi32>
        %56 = arith.cmpi ne, %54, %55 : vector<128x128xi32>
        %c10_i32_31 = arith.constant 10 : i32
        %57 = vector.broadcast %c10_i32_31 : i32 to vector<128x128xi32>
        %58 = arith.cmpi slt, %54, %57 : vector<128x128xi32>
        %c10_i32_32 = arith.constant 10 : i32
        %59 = vector.broadcast %c10_i32_32 : i32 to vector<128x128xi32>
        %60 = arith.cmpi slt, %55, %59 : vector<128x128xi32>
        %61 = arith.andi %58, %60 : vector<128x128xi1>
        %62 = arith.andi %56, %61 : vector<128x128xi1>
        %cst_33 = arith.constant -0.111111112 : f32
        %63 = vector.broadcast %cst_33 : f32 to vector<128x128xf32>
        %64 = arith.subf %53, %63 : vector<128x128xf32>
        %cst_34 = arith.constant 0.000000e+00 : f32
        %65 = vector.broadcast %cst_34 : f32 to vector<128x128xf32>
        %66 = arith.select %62, %64, %65 : vector<128x128xi1>, vector<128x128xf32>
        %67 = arith.mulf %66, %66 : vector<128x128xf32>
        %68 = vector.shape_cast %67 : vector<128x128xf32> to vector<1x128x128xf32>
        %cst_35 = arith.constant dense<0.000000e+00> : vector<1xf32>
        %69 = vector.multi_reduction <add>, %68, %cst_35 [1, 2] : vector<1x128x128xf32> to vector<1xf32>
        %70 = vector.shape_cast %69 : vector<1xf32> to vector<1x1x1xf32>
        %71 = vector.extract %70[0, 0, 0] : f32 from vector<1x1x1xf32>
        %72 = vector.broadcast %71 : f32 to vector<1x1xf32>
        %cst_36 = arith.constant 0.0222222228 : f32
        %73 = vector.broadcast %cst_36 : f32 to vector<1x1xf32>
        %74 = arith.mulf %72, %73 : vector<1x1xf32>
        %c0_37 = arith.constant 0 : index
        %c0_38 = arith.constant 0 : index
        %75 = vector.load %arg11[%c0_37, %c0_38] : memref<1x1xf32, #tpu.memory_space<vmem>>, vector<1x1xf32>
        tpu.vector_store %arg11[%c0_37, %c0_38], %74 {strides = array<i32>} : memref<1x1xf32, #tpu.memory_space<vmem>>, vector<1x1xf32>,
        tpu.yield
      }) : () -> ()
    } else {
    }
    %c0 = arith.constant 0 : index
    %c0_4 = arith.constant 0 : index
    %8 = vector.load %arg3[%c0, %c0_4] : memref<64x64xf32, #tpu.memory_space<vmem>>, vector<64x64xf32>
    %c0_5 = arith.constant 0 : index
    %c0_6 = arith.constant 0 : index
    %9 = vector.load %arg2[%c0_5, %c0_6] : memref<64x1xi32, #tpu.memory_space<vmem>>, vector<64x1xi32>
    %c0_7 = arith.constant 0 : index
    %c0_8 = arith.constant 0 : index
    %10 = vector.load %arg7[%c0_7, %c0_8] : memref<64x128xf32, #tpu.memory_space<vmem>>, vector<64x128xf32>
    %cst = arith.constant dense<0.000000e+00> : vector<64x128xf32>
    %11 = tpu.matmul %8, %10, %cst {dimension_numbers = #tpu.dot_dimension_numbers<[1], [0], [0], [1], [0, 0, 1, 1], [], []>} : vector<64x64xf32>, vector<64x128xf32>, vector<64x128xf32> -> vector<64x128xf32>
    %12 = tpu.iota {dimensions = array<i32: 1>} : vector<64x128xi32>
    %13 = vector.broadcast %9 : vector<64x1xi32> to vector<64x128xi32>
    %14 = arith.cmpi eq, %12, %13 : vector<64x128xi32>
    %c0_9 = arith.constant 0 : index
    %c0_10 = arith.constant 0 : index
    %15 = vector.load %arg12[%c0_9, %c0_10] : memref<1x128xf32, #tpu.memory_space<vmem>>, vector<1x128xf32>
    %cst_11 = arith.constant 2.000000e+00 : f32
    %16 = vector.broadcast %cst_11 : f32 to vector<64x128xf32>
    %17 = arith.mulf %16, %11 : vector<64x128xf32>
    %18 = vector.broadcast %15 : vector<1x128xf32> to vector<64x128xf32>
    %19 = arith.subf %18, %17 : vector<64x128xf32>
    %cst_12 = arith.constant 0.000000e+00 : f32
    %20 = vector.broadcast %cst_12 : f32 to vector<64x128xf32>
    %21 = arith.select %14, %19, %20 : vector<64x128xi1>, vector<64x128xf32>
    %c0_13 = arith.constant 0 : index
    %c0_14 = arith.constant 0 : index
    %22 = vector.load %arg9[%c0_13, %c0_14] : memref<1x128xf32, #tpu.memory_space<vmem>>, vector<1x128xf32>
    %cst_15 = arith.constant dense<0.000000e+00> : vector<128xf32>
    %23 = vector.multi_reduction <add>, %21, %cst_15 [0] : vector<64x128xf32> to vector<128xf32>
    %24 = vector.shape_cast %23 : vector<128xf32> to vector<1x128xf32>
    %25 = arith.addf %22, %24 : vector<1x128xf32>
    %c0_16 = arith.constant 0 : index
    %c0_17 = arith.constant 0 : index
    %26 = vector.load %arg9[%c0_16, %c0_17] : memref<1x128xf32, #tpu.memory_space<vmem>>, vector<1x128xf32>
    tpu.vector_store %arg9[%c0_16, %c0_17], %25 {strides = array<i32>} : memref<1x128xf32, #tpu.memory_space<vmem>>, vector<1x128xf32>,
    %c0_18 = arith.constant 0 : index
    %c0_19 = arith.constant 0 : index
    %27 = vector.load %arg10[%c0_18, %c0_19] : memref<1x64xf32, #tpu.memory_space<vmem>>, vector<1x64xf32>
    %28 = arith.mulf %8, %8 : vector<64x64xf32>
    %cst_20 = arith.constant dense<0.000000e+00> : vector<64xf32>
    %29 = vector.multi_reduction <add>, %28, %cst_20 [0] : vector<64x64xf32> to vector<64xf32>
    %30 = vector.shape_cast %29 : vector<64xf32> to vector<1x64xf32>
    %31 = arith.addf %27, %30 : vector<1x64xf32>
    %c0_21 = arith.constant 0 : index
    %c0_22 = arith.constant 0 : index
    %32 = vector.load %arg10[%c0_21, %c0_22] : memref<1x64xf32, #tpu.memory_space<vmem>>, vector<1x64xf32>
    tpu.vector_store %arg10[%c0_21, %c0_22], %31 {strides = array<i32>} : memref<1x64xf32, #tpu.memory_space<vmem>>, vector<1x64xf32>,
    %c1_i32 = arith.constant 1 : i32
    %33 = arith.cmpi eq, %arg1, %c1_i32 : i32
    %34 = arith.extui %33 : i1 to i32
    %c0_i32_23 = arith.constant 0 : i32
    %35 = arith.cmpi ne, %34, %c0_i32_23 : i32
    scf.if %35 {
      %c0_24 = arith.constant 0 : index
      %c0_25 = arith.constant 0 : index
      %36 = vector.load %arg10[%c0_24, %c0_25] : memref<1x64xf32, #tpu.memory_space<vmem>>, vector<1x64xf32>
      %37 = vector.shape_cast %36 : vector<1x64xf32> to vector<1x1x64xf32>
      %cst_26 = arith.constant dense<0.000000e+00> : vector<1xf32>
      %38 = vector.multi_reduction <add>, %37, %cst_26 [1, 2] : vector<1x1x64xf32> to vector<1xf32>
      %39 = vector.shape_cast %38 : vector<1xf32> to vector<1x1x1xf32>
      %40 = vector.extract %39[0, 0, 0] : f32 from vector<1x1x1xf32>
      %41 = vector.broadcast %40 : f32 to vector<1x1xf32>
      %c0_27 = arith.constant 0 : index
      %c0_28 = arith.constant 0 : index
      %42 = vector.load %arg9[%c0_27, %c0_28] : memref<1x128xf32, #tpu.memory_space<vmem>>, vector<1x128xf32>
      %43 = vector.shape_cast %42 : vector<1x128xf32> to vector<1x1x128xf32>
      %cst_29 = arith.constant dense<0.000000e+00> : vector<1xf32>
      %44 = vector.multi_reduction <add>, %43, %cst_29 [1, 2] : vector<1x1x128xf32> to vector<1xf32>
      %45 = vector.shape_cast %44 : vector<1xf32> to vector<1x1x1xf32>
      %46 = vector.extract %45[0, 0, 0] : f32 from vector<1x1x1xf32>
      %47 = vector.broadcast %46 : f32 to vector<1x1xf32>
      %48 = arith.addf %41, %47 : vector<1x1xf32>
      %cst_30 = arith.constant 2.500000e-03 : f32
      %49 = vector.broadcast %cst_30 : f32 to vector<1x1xf32>
      %50 = arith.mulf %49, %48 : vector<1x1xf32>
      %c0_31 = arith.constant 0 : index
      %c0_32 = arith.constant 0 : index
      %51 = vector.load %arg11[%c0_31, %c0_32] : memref<1x1xf32, #tpu.memory_space<vmem>>, vector<1x1xf32>
      %cst_33 = arith.constant 1.000000e+00 : f32
      %52 = vector.broadcast %cst_33 : f32 to vector<1x1xf32>
      %53 = arith.mulf %52, %51 : vector<1x1xf32>
      %54 = arith.addf %50, %53 : vector<1x1xf32>
      %55 = tpu.iota {dimensions = array<i32: 1>} : vector<1x8x128xi32>
      %56 = tpu.iota {dimensions = array<i32: 2>} : vector<1x8x128xi32>
      %c0_i32_34 = arith.constant 0 : i32
      %57 = vector.broadcast %c0_i32_34 : i32 to vector<1x8x128xi32>
      %58 = arith.cmpi eq, %55, %57 : vector<1x8x128xi32>
      %c0_i32_35 = arith.constant 0 : i32
      %59 = vector.broadcast %c0_i32_35 : i32 to vector<1x8x128xi32>
      %60 = arith.cmpi eq, %56, %59 : vector<1x8x128xi32>
      %61 = arith.andi %58, %60 : vector<1x8x128xi1>
      %62 = vector.shape_cast %54 : vector<1x1xf32> to vector<1x1x1xf32>
      %cst_36 = arith.constant 0.000000e+00 : f32
      %63 = vector.shape_cast %62 : vector<1x1x1xf32> to vector<1x1x1xf32>
      %64 = vector.broadcast %63 : vector<1x1x1xf32> to vector<1x8x128xf32>
      %65 = vector.broadcast %cst_36 : f32 to vector<1x8x128xf32>
      %66 = arith.select %61, %64, %65 : vector<1x8x128xi1>, vector<1x8x128xf32>
      %c0_37 = arith.constant 0 : index
      %c0_38 = arith.constant 0 : index
      %c0_39 = arith.constant 0 : index
      %67 = vector.load %arg6[%c0_37, %c0_38, %c0_39] : memref<1x8x128xf32, #tpu.memory_space<vmem>>, vector<1x8x128xf32>
      tpu.vector_store %arg6[%c0_37, %c0_38, %c0_39], %66 {strides = array<i32>} : memref<1x8x128xf32, #tpu.memory_space<vmem>>, vector<1x8x128xf32>,
    } else {
    }
    return
  }
  func.func @transform_0(%arg0: i32, %arg1: i32) -> (i32, i32) {
    %c2_i32 = arith.constant 2 : i32
    %0 = arith.muli %arg0, %c2_i32 : i32
    %1 = arith.addi %0, %arg1 : i32
    %c0_i32 = arith.constant 0 : i32
    %c0_i32_0 = arith.constant 0 : i32
    return %1, %c0_i32 : i32, i32
  }
  func.func @transform_1(%arg0: i32, %arg1: i32) -> (i32, i32) {
    %c2_i32 = arith.constant 2 : i32
    %0 = arith.muli %arg0, %c2_i32 : i32
    %1 = arith.addi %0, %arg1 : i32
    %c0_i32 = arith.constant 0 : i32
    %c0_i32_0 = arith.constant 0 : i32
    return %1, %c0_i32 : i32, i32
  }
  func.func @transform_4(%arg0: i32, %arg1: i32) -> (i32, i32, i32) {
    %c0_i32 = arith.constant 0 : i32
    %c0_i32_0 = arith.constant 0 : i32
    %c0_i32_1 = arith.constant 0 : i32
    return %arg0, %c0_i32, %c0_i32_0 : i32, i32, i32
  }
}

</mosaic_0001>

<llo_original>
// kernel: tpu_custom_call.1
$region0: #{tpu_custom_call.1}
  #allocation0 [shape = 'u32[]', space=smem, size = 0x4, offset = 0x4, fixed_abs, tag = 'smem constant byte address 0x4 - core index']
  #allocation1 [shape = 'u32[144,128]{1,0:T(1,128)}', space=vmem, size = 0x12000, scoped, tag = 'internal scratch']
  #allocation2 [shape = 'f32[64,128]{1,0:T(8,128)}', space=vmem, size = 0x8000, scoped, tag = 'scratch operand']
  #allocation3 [shape = 's32[1]{0}', space=sflag, size = 0x4, scoped, tag = 'scratch operand']
  #allocation4 [shape = 'f32[1,128]{1,0:T(1,128)}', space=vmem, size = 0x200, scoped, tag = 'scratch operand']
  #allocation5 [shape = 'f32[1,64]{1,0:T(1,128)}', space=vmem, size = 0x200, scoped, tag = 'scratch operand']
  #allocation6 [shape = 'f32[1,1]{1,0:T(1,128)}', space=vmem, size = 0x200, scoped, tag = 'scratch operand']
  #allocation7 [shape = 'f32[1,128]{1,0:T(1,128)}', space=vmem, size = 0x200, scoped, tag = 'scratch operand']
  #allocation10 [shape = 's32[]', space=sflag, size = 0x4, offset = 0, fixed_abs, tag = 'sflag constant byte address 0x0 - dummy sync flag']
  #allocation13 [shape = 's32[]', space=sflag, size = 0x4, offset = 0, fixed_abs, tag = 'sflag constant byte address 0x0 - dummy sync flag']
  %s0 = inlined_call_operand.vmem [shape: s32[256,1], index: 0, kind: input, shape index: {}]
  %s1 = inlined_call_operand.vmem [shape: f32[256,64], index: 1, kind: input, shape index: {}]
  %s2 = inlined_call_operand.vmem [shape: f32[64,128], index: 2, kind: input, shape index: {}]
  %s3 = inlined_call_operand.vmem [shape: f32[128,64], index: 3, kind: input, shape index: {}]
  %s4 = inlined_call_operand.hbm [shape: f32[2,8,128], index: 4, kind: output, shape index: {}]
  %s5 = sld [smem:[#allocation0]]
  $region122: #{tpu_custom_call.1} parent=0
    _
  %s7 = ssub.s32 1, %s5
  %s8 = scalar_select 0, %s7, %s5
  $region1: #{tpu_custom_call.1} parent=0
    #allocation8 [shape = 'u8[8192]{0}', space=vmem, size = 0x2000, scoped, tag = 'output window, operand 0']
    #allocation9 [shape = 's32[2]{0}', space=sflag, size = 0x8, scoped, tag = 'scoped memory for tpu_custom_call.1']
    %9 = vsyncpa [#allocation9], 0
    %s10 = scalar_lea.sflag [#allocation9], 1
    %11 = vsyncpa %s10, 0
    loop: start=0, step=1, limit=6
    $region2: #{tpu_custom_call.1} parent=1 // loop_pre_header
      _
    $region3: #{tpu_custom_call.1} parent=1 // loop_header
      %s13 = sphi 0, %s17
      %p14 = scmp.ge.s32.totalorder %s13, 6
      %s20 = sphi 0, %s32
      %s21 = sphi 0, %s28
      %s22 = sphi 0, %s20
      %s23 = sphi 0, %s21
      %s24 = sphi 0, %s22
      %s25 = sphi 0, %s23
      %s39 = sphi 0, %s41
      %s42 = sphi 0, %s39
      %s43 = sphi 0, %s42
      %s59 = sphi 0, %s43
      %s69 = sphi 0, %s71
      %s72 = sphi 0, %s69
      %s73 = sphi 0, %s72
      %s89 = sphi 0, %s73
      %s95 = sphi 0, %s97
      %s98 = sphi 0, %s95
      %s99 = sphi 0, %s98
      %s115 = sphi 0, %s99
    $region4: #{tpu_custom_call.1} parent=1 // loop_header_branch
      %16 = sbr.rel (%p14) target = $region8
    $region5: #{tpu_custom_call.1} parent=1 // loop_body
      %s18 = ssub.s32 %s13, 1
      %s19 = ssub.s32 %s13, 2
      %s26 = sadd.s32 1, %s21
      %p27 = scmp.ge.s32.totalorder %s26, 2
      %s28 = scalar_select %p27, 0, %s26
      %s29 = sadd.s32 1, %s20
      %s30 = scalar_select %p27, %s29, %s20
      %p31 = scmp.ge.s32.totalorder %s30, 2
      %s32 = scalar_select %p31, 0, %s30
      %s33 = smul.u32 %s20, 2
      %s34 = sadd.s32 %s33, %s21
      %s35 = smul.u32 %s32, 2
      %s36 = sadd.s32 %s35, %s28
      %s37 = ssub.s32 %s34, %s36
      %p38 = scmp.eq.s32.totalorder %s37, 0
      %s40 = sadd.s32 %s39, 1
      %s41 = scalar_select %p38, %s39, %s40
      %p44 = pneg %p38
      %p45 = scmp.eq.s32.totalorder %s13, 3
      %p46 = por %p44, %p45
      %p47 = scmp.ne.s32.totalorder %s39, %s42
      %p48 = scmp.eq.s32.totalorder %s13, 0
      %p49 = por %p47, %p48
      %p50 = scmp.ne.s32.totalorder %s39, %s42
      %p51 = scmp.eq.s32.totalorder %s18, 3
      %p52 = por %p50, %p51
      %p53 = scmp.ne.s32.totalorder %s42, %s43
      %p54 = scmp.eq.s32.totalorder %s18, 0
      %p55 = por %p53, %p54
      %p56 = scmp.ne.s32.totalorder %s42, %s43
      %p57 = scmp.eq.s32.totalorder %s19, 3
      %p58 = por %p56, %p57
      %p60 = scmp.ne.s32.totalorder %s43, %s59
      %p61 = scmp.eq.s32.totalorder %s19, 0
      %p62 = por %p60, %p61
      %s63 = smul.u32 %s20, 2
      %s64 = sadd.s32 %s63, %s21
      %s65 = smul.u32 %s32, 2
      %s66 = sadd.s32 %s65, %s28
      %s67 = ssub.s32 %s64, %s66
      %p68 = scmp.eq.s32.totalorder %s67, 0
      %s70 = sadd.s32 %s69, 1
      %s71 = scalar_select %p68, %s69, %s70
      %p74 = pneg %p68
      %p75 = scmp.eq.s32.totalorder %s13, 3
      %p76 = por %p74, %p75
      %p77 = scmp.ne.s32.totalorder %s69, %s72
      %p78 = scmp.eq.s32.totalorder %s13, 0
      %p79 = por %p77, %p78
      %p80 = scmp.ne.s32.totalorder %s69, %s72
      %p81 = scmp.eq.s32.totalorder %s18, 3
      %p82 = por %p80, %p81
      %p83 = scmp.ne.s32.totalorder %s72, %s73
      %p84 = scmp.eq.s32.totalorder %s18, 0
      %p85 = por %p83, %p84
      %p86 = scmp.ne.s32.totalorder %s72, %s73
      %p87 = scmp.eq.s32.totalorder %s19, 3
      %p88 = por %p86, %p87
      %p90 = scmp.ne.s32.totalorder %s73, %s89
      %p91 = scmp.eq.s32.totalorder %s19, 0
      %p92 = por %p90, %p91
      %s93 = ssub.s32 %s20, %s32
      %p94 = scmp.eq.s32.totalorder %s93, 0
      %s96 = sadd.s32 %s95, 1
      %s97 = scalar_select %p94, %s95, %s96
      %p100 = pneg %p94
      %p101 = scmp.eq.s32.totalorder %s13, 3
      %p102 = por %p100, %p101
      %p103 = scmp.ne.s32.totalorder %s95, %s98
      %p104 = scmp.eq.s32.totalorder %s13, 0
      %p105 = por %p103, %p104
      %p106 = scmp.ne.s32.totalorder %s95, %s98
      %p107 = scmp.eq.s32.totalorder %s18, 3
      %p108 = por %p106, %p107
      %p109 = scmp.ne.s32.totalorder %s98, %s99
      %p110 = scmp.eq.s32.totalorder %s18, 0
      %p111 = por %p109, %p110
      %p112 = scmp.ne.s32.totalorder %s98, %s99
      %p113 = scmp.eq.s32.totalorder %s19, 3
      %p114 = por %p112, %p113
      %p116 = scmp.ne.s32.totalorder %s99, %s115
      %p117 = scmp.eq.s32.totalorder %s19, 0
      %p118 = por %p116, %p117
      %p119 = scmp.le.s32.totalorder 1, %s13
      %p120 = scmp.lt.s32.totalorder %s13, 5
      %p121 = pnand %p119, %p120
      %p122 = pneg %p121
      // Predicated region
      $region9: #{tpu_custom_call.1} parent=5 // pred_check
        _
      $region10: #{tpu_custom_call.1} parent=5 // pred_check_branch
        %124 = sbr.rel (%p121) target = $region12
      $region11: #{tpu_custom_call.1} parent=5 // pred_region
        %s125 = ssub.s32 %s13, 1
      $region12: #{tpu_custom_call.1} parent=5 // pred_fallthru
        _
      %p126 = scmp.lt.s32.totalorder %s13, 4
      // Predicated region
      $region13: #{tpu_custom_call.1} parent=5 // pred_check
        %p127 = pneg %p126
      $region14: #{tpu_custom_call.1} parent=5 // pred_check_branch
        %129 = sbr.rel (%p127) target = $region16
      $region15: #{tpu_custom_call.1} parent=5 // pred_region
        // Predicated region
        $region17: #{tpu_custom_call.1} parent=15 // pred_check
          %p130 = pneg %p49
        $region18: #{tpu_custom_call.1} parent=15 // pred_check_branch
          %132 = sbr.rel (%p130) target = $region20
        $region19: #{tpu_custom_call.1} parent=15 // pred_region
          %s133 = smul.u32 %s20, 2
          %s134 = sadd.s32 %s133, %s21
          %s135 = smul.u32 8, %s134
          %p136 = scmp.lt.s32.totalorder %s135, 31
          %s137 = scalar_select %p136, %s135, 31
          %s138 = smul.addr %s137, 8
          %s139 = scalar_lea.vmem %s0, %s138
          %s140 = smul.u32 %s20, 2
          %s141 = sadd.s32 %s140, %s21
          %s142 = smul.u32 8, %s141
        $region20: #{tpu_custom_call.1} parent=15 // pred_fallthru
          _
        // Predicated region
        $region21: #{tpu_custom_call.1} parent=15 // pred_check
          %p143 = pneg %p79
        $region22: #{tpu_custom_call.1} parent=15 // pred_check_branch
          %145 = sbr.rel (%p143) target = $region24
        $region23: #{tpu_custom_call.1} parent=15 // pred_region
          %s146 = smul.u32 %s20, 2
          %s147 = sadd.s32 %s146, %s21
          %s148 = smul.u32 8, %s147
          %p149 = scmp.lt.s32.totalorder %s148, 31
          %s150 = scalar_select %p149, %s148, 31
          %s151 = smul.addr %s150, 8
          %s152 = scalar_lea.vmem %s1, %s151
          %s153 = smul.u32 %s20, 2
          %s154 = sadd.s32 %s153, %s21
          %s155 = smul.u32 8, %s154
        $region24: #{tpu_custom_call.1} parent=15 // pred_fallthru
          _
      $region16: #{tpu_custom_call.1} parent=5 // pred_fallthru
        _
      %p156 = scmp.le.s32.totalorder 1, %s13
      %p157 = scmp.lt.s32.totalorder %s13, 5
      %p158 = pnand %p156, %p157
      %p159 = pneg %p158
      // Predicated region
      $region25: #{tpu_custom_call.1} parent=5 // pred_check
        _
      $region26: #{tpu_custom_call.1} parent=5 // pred_check_branch
        %161 = sbr.rel (%p158) target = $region28
      $region27: #{tpu_custom_call.1} parent=5 // pred_region
        %s162 = ssub.s32 %s13, 1
        %s163 = smul.u32 %s22, 2
        %s164 = sadd.s32 %s163, %s23
        %s165 = smul.u32 8, %s164
        %p166 = scmp.lt.s32.totalorder %s165, 31
        %s167 = scalar_select %p166, %s165, 31
        %s168 = smul.addr %s167, 8
        %s169 = scalar_lea.vmem %s0, %s168
        %p170 = pneg %p55
        %p171 = pneg %p52
        %s172 = smul.u32 %s22, 2
        %s173 = sadd.s32 %s172, %s23
        %s174 = smul.u32 8, %s173
        %p175 = scmp.lt.s32.totalorder %s174, 31
        %s176 = scalar_select %p175, %s174, 31
        %s177 = smul.addr %s176, 8
        %s178 = scalar_lea.vmem %s1, %s177
        %p179 = pneg %p85
        %p180 = pneg %p82
        %p181 = pneg %p111
        %p182 = pneg %p108
        %s183 = sand.u32 %s98, 1
        %s184 = scalar_lea.sflag [#allocation9], %s183
        %s185 = sand.u32 %s98, 1
        %s186 = smul.addr %s185, 8
        %s187 = scalar_lea.vmem [#allocation8], %s186
        %s188 = smul.u32 %s22, 2
        %s189 = sadd.s32 %s188, %s23
        %s190 = smul.u32 8, %s189
        %p191 = scmp.lt.s32.totalorder %s190, 31
        %s192 = scalar_select %p191, %s190, 31
        %s193 = smul.addr %s192, 8
        %s194 = scalar_lea.vmem %s0, %s193
        %s195 = smul.u32 %s22, 2
        %s196 = sadd.s32 %s195, %s23
        %s197 = smul.u32 8, %s196
        %s198 = smul.u32 %s22, 2
        %s199 = sadd.s32 %s198, %s23
        %s200 = smul.u32 8, %s199
        %p201 = scmp.lt.s32.totalorder %s200, 31
        %s202 = scalar_select %p201, %s200, 31
        %s203 = smul.addr %s202, 8
        %s204 = scalar_lea.vmem %s1, %s203
        %s205 = smul.u32 %s22, 2
        %s206 = sadd.s32 %s205, %s23
        %s207 = smul.u32 8, %s206
        %p208 = scmp.eq.s32.totalorder %s23, 0
        // Predicated region
        $region29: #{tpu_custom_call.1} parent=27 // pred_check
          %p209 = pneg %p208
        $region30: #{tpu_custom_call.1} parent=27 // pred_check_branch
          %211 = sbr.rel (%p209) target = $region32
        $region31: #{tpu_custom_call.1} parent=27 // pred_region
          %p213 = scmp.lt.u32.totalorder 64, 8
          %p214 = pneg %p213
          // Predicated region
          $region33: #{tpu_custom_call.1} parent=31 // pred_check
            _
          $region34: #{tpu_custom_call.1} parent=31 // pred_check_branch
            %216 = sbr.rel (%p213) target = $region36
          $region35: #{tpu_custom_call.1} parent=31 // pred_region
            %s231 = sand.u32 64, 7
            %p232 = scmp.eq.s32.totalorder %s231, 0
            // Predicated region
            $region48: #{tpu_custom_call.1} parent=35 // pred_check
              %p233 = pneg %p232
            $region49: #{tpu_custom_call.1} parent=35 // pred_check_branch
              %235 = sbr.rel (%p233) target = $region51
            $region50: #{tpu_custom_call.1} parent=35 // pred_region
              loop: start=0, step=1, limit=1
              $region52: #{tpu_custom_call.1} parent=50 // loop_pre_header
                _
              $region53: #{tpu_custom_call.1} parent=50 // loop_header
                %s237 = sphi 0, %s241
                %p238 = scmp.ge.s32.totalorder %s237, 1
                %s242 = sphi %s2, %s2
                %s243 = sphi [#allocation2], [#allocation2]
              $region54: #{tpu_custom_call.1} parent=50 // loop_header_branch
                %240 = sbr.rel (%p238) target = $region58
              $region55: #{tpu_custom_call.1} parent=50 // loop_body
                %v244 = vld [vmem:[%s242] sm:$0xff]
                %245 = vst [vmem:[%s243] sm:$0xff] %v244
                %v246 = vld [vmem:[%s242 + $0x8] sm:$0xff]
                %247 = vst [vmem:[%s243 + $0x8] sm:$0xff] %v246
                %v248 = vld [vmem:[%s242 + $0x10] sm:$0xff]
                %249 = vst [vmem:[%s243 + $0x10] sm:$0xff] %v248
                %v250 = vld [vmem:[%s242 + $0x18] sm:$0xff]
                %251 = vst [vmem:[%s243 + $0x18] sm:$0xff] %v250
                %v252 = vld [vmem:[%s242 + $0x20] sm:$0xff]
                %253 = vst [vmem:[%s243 + $0x20] sm:$0xff] %v252
                %v254 = vld [vmem:[%s242 + $0x28] sm:$0xff]
                %255 = vst [vmem:[%s243 + $0x28] sm:$0xff] %v254
                %v256 = vld [vmem:[%s242 + $0x30] sm:$0xff]
                %257 = vst [vmem:[%s243 + $0x30] sm:$0xff] %v256
                %v258 = vld [vmem:[%s242 + $0x38] sm:$0xff]
                %259 = vst [vmem:[%s243 + $0x38] sm:$0xff] %v258
              $region56: #{tpu_custom_call.1} parent=50 // loop_footer
                %s241 = sadd.s32 1, %s237
              $region57: #{tpu_custom_call.1} parent=50 // loop_footer_branch
                %236 = sbr.rel target = $region53
              $region58: #{tpu_custom_call.1} parent=50 // loop_exit
                _
            $region51: #{tpu_custom_call.1} parent=35 // pred_fallthru
              _
            %p260 = pneg %p232
            // Predicated region
            $region59: #{tpu_custom_call.1} parent=35 // pred_check
              _
            $region60: #{tpu_custom_call.1} parent=35 // pred_check_branch
              %262 = sbr.rel (%p232) target = $region62
            $region61: #{tpu_custom_call.1} parent=35 // pred_region
              %s263 = sand.u32 64, 7
            $region62: #{tpu_custom_call.1} parent=35 // pred_fallthru
              _
          $region36: #{tpu_custom_call.1} parent=31 // pred_fallthru
            _
          // Predicated region
          $region37: #{tpu_custom_call.1} parent=31 // pred_check
            %p217 = pneg %p213
          $region38: #{tpu_custom_call.1} parent=31 // pred_check_branch
            %219 = sbr.rel (%p217) target = $region40
          $region39: #{tpu_custom_call.1} parent=31 // pred_region
            %s220 = sshllo.u32 0, 64
            loop: start=0, step=1, limit=1
            $region41: #{tpu_custom_call.1} parent=39 // loop_pre_header
              _
            $region42: #{tpu_custom_call.1} parent=39 // loop_header
              %s222 = sphi 0, %s226
              %p223 = scmp.ge.s32.totalorder %s222, 1
              %s227 = sphi %s2, %s2
              %s228 = sphi [#allocation2], [#allocation2]
            $region43: #{tpu_custom_call.1} parent=39 // loop_header_branch
              %225 = sbr.rel (%p223) target = $region47
            $region44: #{tpu_custom_call.1} parent=39 // loop_body
              %v229 = vld [vmem:[%s227] sm:%s220]
              %230 = vst [vmem:[%s228] sm:%s220] %v229
            $region45: #{tpu_custom_call.1} parent=39 // loop_footer
              %s226 = sadd.s32 1, %s222
            $region46: #{tpu_custom_call.1} parent=39 // loop_footer_branch
              %221 = sbr.rel target = $region42
            $region47: #{tpu_custom_call.1} parent=39 // loop_exit
              _
          $region40: #{tpu_custom_call.1} parent=31 // pred_fallthru
            _
          // Predicated region
          $region63: #{tpu_custom_call.1} parent=31 // pred_check
            _
          $region64: #{tpu_custom_call.1} parent=31 // pred_check_branch
            %266 = sbr.rel (0) target = $region66
          $region65: #{tpu_custom_call.1} parent=31 // pred_region
            %267 = vsyncadd [#allocation3], 1024
          $region66: #{tpu_custom_call.1} parent=31 // pred_fallthru
            _
          %s268 = smul.u32 64, 1
          %s269 = sshll.u32 %s268, 4
          %270 = dma.done [#allocation3], %s269
          %v271 = vld [vmem:[#allocation2] sm:$0xff]
          %v272 = vld [vmem:[#allocation2 + $0x8] sm:$0xff]
          %v273 = vld [vmem:[#allocation2 + $0x10] sm:$0xff]
          %v274 = vld [vmem:[#allocation2 + $0x18] sm:$0xff]
          %v275 = vld [vmem:[#allocation2 + $0x20] sm:$0xff]
          %v276 = vld [vmem:[#allocation2 + $0x28] sm:$0xff]
          %v277 = vld [vmem:[#allocation2 + $0x30] sm:$0xff]
          %v278 = vld [vmem:[#allocation2 + $0x38] sm:$0xff]
          %v279 = vmul.f32 %v271, %v271
          %v280 = vmul.f32 %v272, %v272
          %v281 = vmul.f32 %v273, %v273
          %v282 = vmul.f32 %v274, %v274
          %v283 = vmul.f32 %v275, %v275
          %v284 = vmul.f32 %v276, %v276
          %v285 = vmul.f32 %v277, %v277
          %v286 = vmul.f32 %v278, %v278
          %v287 = vadd.f32 %v279, %v280
          %v288 = vadd.f32 %v287, %v281
          %v289 = vadd.f32 %v288, %v282
          %v290 = vadd.f32 %v289, %v283
          %v291 = vadd.f32 %v290, %v284
          %v292 = vadd.f32 %v291, %v285
          %v293 = vadd.f32 %v292, %v286
          %v294 = vrot.slane %v293, 4
          %v295 = vadd.f32 %v293, %v294
          %v296 = vrot.slane %v295, 2
          %v297 = vadd.f32 %v295, %v296
          %v298 = vrot.slane %v297, 1
          %v299 = vadd.f32 %v297, %v298
          %300 = vst [vmem:[#allocation7] sm:$0x1] %v299
          %301 = vst [vmem:[#allocation4] sm:$0x1] 0.0
          %vm302 = vcmask 516096
          %303 = vst.msk [vmem:[#allocation5] sm:$0x1] %vm302, 0.0
          %vm304 = vcmask 0
          %305 = vst.msk [vmem:[#allocation6] sm:$0x1] %vm304, 0.0
        $region32: #{tpu_custom_call.1} parent=27 // pred_fallthru
          _
        %p306 = scmp.eq.s32.totalorder %s22, 0
        %p307 = pnand %p208, %p306
        %p308 = pneg %p307
        // Predicated region
        $region67: #{tpu_custom_call.1} parent=27 // pred_check
          _
        $region68: #{tpu_custom_call.1} parent=27 // pred_check_branch
          %310 = sbr.rel (%p307) target = $region70
        $region69: #{tpu_custom_call.1} parent=27 // pred_region
          $region71: #{tpu_custom_call.1} parent=69
            #allocation11 [shape = 'u8[65536]{0}', space=vmem, size = 0x10000, scoped, tag = 'scoped memory for tpu_custom_call.1']
            #allocation12 [shape = 's32[1]{0}', space=sflag, size = 0x4, scoped, tag = 'scoped memory for tpu_custom_call.1']
            %p312 = scmp.lt.u32.totalorder 128, 8
            %p313 = pneg %p312
            // Predicated region
            $region72: #{tpu_custom_call.1} parent=71 // pred_check
              _
            $region73: #{tpu_custom_call.1} parent=71 // pred_check_branch
              %315 = sbr.rel (%p312) target = $region75
            $region74: #{tpu_custom_call.1} parent=71 // pred_region
              %s330 = sand.u32 128, 7
              %p331 = scmp.eq.s32.totalorder %s330, 0
              // Predicated region
              $region87: #{tpu_custom_call.1} parent=74 // pred_check
                %p332 = pneg %p331
              $region88: #{tpu_custom_call.1} parent=74 // pred_check_branch
                %334 = sbr.rel (%p332) target = $region90
              $region89: #{tpu_custom_call.1} parent=74 // pred_region
                loop: start=0, step=1, limit=1
                $region91: #{tpu_custom_call.1} parent=89 // loop_pre_header
                  _
                $region92: #{tpu_custom_call.1} parent=89 // loop_header
                  %s336 = sphi 0, %s340
                  %p337 = scmp.ge.s32.totalorder %s336, 1
                  %s341 = sphi %s3, %s3
                  %s342 = sphi [#allocation11], [#allocation11]
                $region93: #{tpu_custom_call.1} parent=89 // loop_header_branch
                  %339 = sbr.rel (%p337) target = $region97
                $region94: #{tpu_custom_call.1} parent=89 // loop_body
                  %v343 = vld [vmem:[%s341] sm:$0xff]
                  %344 = vst [vmem:[%s342] sm:$0xff] %v343
                  %v345 = vld [vmem:[%s341 + $0x8] sm:$0xff]
                  %346 = vst [vmem:[%s342 + $0x8] sm:$0xff] %v345
                  %v347 = vld [vmem:[%s341 + $0x10] sm:$0xff]
                  %348 = vst [vmem:[%s342 + $0x10] sm:$0xff] %v347
                  %v349 = vld [vmem:[%s341 + $0x18] sm:$0xff]
                  %350 = vst [vmem:[%s342 + $0x18] sm:$0xff] %v349
                  %v351 = vld [vmem:[%s341 + $0x20] sm:$0xff]
                  %352 = vst [vmem:[%s342 + $0x20] sm:$0xff] %v351
                  %v353 = vld [vmem:[%s341 + $0x28] sm:$0xff]
                  %354 = vst [vmem:[%s342 + $0x28] sm:$0xff] %v353
                  %v355 = vld [vmem:[%s341 + $0x30] sm:$0xff]
                  %356 = vst [vmem:[%s342 + $0x30] sm:$0xff] %v355
                  %v357 = vld [vmem:[%s341 + $0x38] sm:$0xff]
                  %358 = vst [vmem:[%s342 + $0x38] sm:$0xff] %v357
                  %v359 = vld [vmem:[%s341 + $0x40] sm:$0xff]
                  %360 = vst [vmem:[%s342 + $0x40] sm:$0xff] %v359
                  %v361 = vld [vmem:[%s341 + $0x48] sm:$0xff]
                  %362 = vst [vmem:[%s342 + $0x48] sm:$0xff] %v361
                  %v363 = vld [vmem:[%s341 + $0x50] sm:$0xff]
                  %364 = vst [vmem:[%s342 + $0x50] sm:$0xff] %v363
                  %v365 = vld [vmem:[%s341 + $0x58] sm:$0xff]
                  %366 = vst [vmem:[%s342 + $0x58] sm:$0xff] %v365
                  %v367 = vld [vmem:[%s341 + $0x60] sm:$0xff]
                  %368 = vst [vmem:[%s342 + $0x60] sm:$0xff] %v367
                  %v369 = vld [vmem:[%s341 + $0x68] sm:$0xff]
                  %370 = vst [vmem:[%s342 + $0x68] sm:$0xff] %v369
                  %v371 = vld [vmem:[%s341 + $0x70] sm:$0xff]
                  %372 = vst [vmem:[%s342 + $0x70] sm:$0xff] %v371
                  %v373 = vld [vmem:[%s341 + $0x78] sm:$0xff]
                  %374 = vst [vmem:[%s342 + $0x78] sm:$0xff] %v373
                $region95: #{tpu_custom_call.1} parent=89 // loop_footer
                  %s340 = sadd.s32 1, %s336
                $region96: #{tpu_custom_call.1} parent=89 // loop_footer_branch
                  %335 = sbr.rel target = $region92
                $region97: #{tpu_custom_call.1} parent=89 // loop_exit
                  _
              $region90: #{tpu_custom_call.1} parent=74 // pred_fallthru
                _
              %p375 = pneg %p331
              // Predicated region
              $region98: #{tpu_custom_call.1} parent=74 // pred_check
                _
              $region99: #{tpu_custom_call.1} parent=74 // pred_check_branch
                %377 = sbr.rel (%p331) target = $region101
              $region100: #{tpu_custom_call.1} parent=74 // pred_region
                %s378 = sand.u32 128, 7
              $region101: #{tpu_custom_call.1} parent=74 // pred_fallthru
                _
            $region75: #{tpu_custom_call.1} parent=71 // pred_fallthru
              _
            // Predicated region
            $region76: #{tpu_custom_call.1} parent=71 // pred_check
              %p316 = pneg %p312
            $region77: #{tpu_custom_call.1} parent=71 // pred_check_branch
              %318 = sbr.rel (%p316) target = $region79
            $region78: #{tpu_custom_call.1} parent=71 // pred_region
              %s319 = sshllo.u32 0, 128
              loop: start=0, step=1, limit=1
              $region80: #{tpu_custom_call.1} parent=78 // loop_pre_header
                _
              $region81: #{tpu_custom_call.1} parent=78 // loop_header
                %s321 = sphi 0, %s325
                %p322 = scmp.ge.s32.totalorder %s321, 1
                %s326 = sphi %s3, %s3
                %s327 = sphi [#allocation11], [#allocation11]
              $region82: #{tpu_custom_call.1} parent=78 // loop_header_branch
                %324 = sbr.rel (%p322) target = $region86
              $region83: #{tpu_custom_call.1} parent=78 // loop_body
                %v328 = vld [vmem:[%s326] sm:%s319]
                %329 = vst [vmem:[%s327] sm:%s319] %v328
              $region84: #{tpu_custom_call.1} parent=78 // loop_footer
                %s325 = sadd.s32 1, %s321
              $region85: #{tpu_custom_call.1} parent=78 // loop_footer_branch
                %320 = sbr.rel target = $region81
              $region86: #{tpu_custom_call.1} parent=78 // loop_exit
                _
            $region79: #{tpu_custom_call.1} parent=71 // pred_fallthru
              _
            // Predicated region
            $region102: #{tpu_custom_call.1} parent=71 // pred_check
              _
            $region103: #{tpu_custom_call.1} parent=71 // pred_check_branch
              %381 = sbr.rel (0) target = $region105
            $region104: #{tpu_custom_call.1} parent=71 // pred_region
              %382 = vsyncadd [#allocation12], 2048
            $region105: #{tpu_custom_call.1} parent=71 // pred_fallthru
              _
            %s383 = smul.u32 128, 1
            %s384 = sshll.u32 %s383, 4
            %385 = dma.done [#allocation12], %s384
            %v386 = vld [vmem:[#allocation11] sm:$0xff]
            %v387 = vld [vmem:[#allocation11 + $0x8] sm:$0xff]
            %v388 = vld [vmem:[#allocation11 + $0x10] sm:$0xff]
            %v389 = vld [vmem:[#allocation11 + $0x18] sm:$0xff]
            %v390 = vld [vmem:[#allocation11 + $0x20] sm:$0xff]
            %v391 = vld [vmem:[#allocation11 + $0x28] sm:$0xff]
            %v392 = vld [vmem:[#allocation11 + $0x30] sm:$0xff]
            %v393 = vld [vmem:[#allocation11 + $0x38] sm:$0xff]
            %v394 = vld [vmem:[#allocation11 + $0x40] sm:$0xff]
            %v395 = vld [vmem:[#allocation11 + $0x48] sm:$0xff]
            %v396 = vld [vmem:[#allocation11 + $0x50] sm:$0xff]
            %v397 = vld [vmem:[#allocation11 + $0x58] sm:$0xff]
            %v398 = vld [vmem:[#allocation11 + $0x60] sm:$0xff]
            %v399 = vld [vmem:[#allocation11 + $0x68] sm:$0xff]
            %v400 = vld [vmem:[#allocation11 + $0x70] sm:$0xff]
            %v401 = vld [vmem:[#allocation11 + $0x78] sm:$0xff]
            %v402 = vmul.f32 %v386, %v386
            %v403 = vmul.f32 %v387, %v387
            %v404 = vmul.f32 %v388, %v388
            %v405 = vmul.f32 %v389, %v389
            %v406 = vmul.f32 %v390, %v390
            %v407 = vmul.f32 %v391, %v391
            %v408 = vmul.f32 %v392, %v392
            %v409 = vmul.f32 %v393, %v393
            %v410 = vmul.f32 %v394, %v394
            %v411 = vmul.f32 %v395, %v395
            %v412 = vmul.f32 %v396, %v396
            %v413 = vmul.f32 %v397, %v397
            %v414 = vmul.f32 %v398, %v398
            %v415 = vmul.f32 %v399, %v399
            %v416 = vmul.f32 %v400, %v400
            %v417 = vmul.f32 %v401, %v401
            %vm418 = vcmask 523264
            %v419 = vsel %vm418, %v402, 0.0
            %420 = vadd.xlane.f32.xlu0 %v419
            %v421 = vpop.xlane.xlu0 %420
            %v422 = vsel %vm418, %v403, 0.0
            %423 = vadd.xlane.f32.xlu0 %v422
            %v424 = vpop.xlane.xlu0 %423
            %v425 = vsel %vm418, %v404, 0.0
            %426 = vadd.xlane.f32.xlu0 %v425
            %v427 = vpop.xlane.xlu0 %426
            %v428 = vsel %vm418, %v405, 0.0
            %429 = vadd.xlane.f32.xlu0 %v428
            %v430 = vpop.xlane.xlu0 %429
            %v431 = vsel %vm418, %v406, 0.0
            %432 = vadd.xlane.f32.xlu0 %v431
            %v433 = vpop.xlane.xlu0 %432
            %v434 = vsel %vm418, %v407, 0.0
            %435 = vadd.xlane.f32.xlu0 %v434
            %v436 = vpop.xlane.xlu0 %435
            %v437 = vsel %vm418, %v408, 0.0
            %438 = vadd.xlane.f32.xlu0 %v437
            %v439 = vpop.xlane.xlu0 %438
            %v440 = vsel %vm418, %v409, 0.0
            %441 = vadd.xlane.f32.xlu0 %v440
            %v442 = vpop.xlane.xlu0 %441
            %v443 = vsel %vm418, %v410, 0.0
            %444 = vadd.xlane.f32.xlu0 %v443
            %v445 = vpop.xlane.xlu0 %444
            %v446 = vsel %vm418, %v411, 0.0
            %447 = vadd.xlane.f32.xlu0 %v446
            %v448 = vpop.xlane.xlu0 %447
            %v449 = vsel %vm418, %v412, 0.0
            %450 = vadd.xlane.f32.xlu0 %v449
            %v451 = vpop.xlane.xlu0 %450
            %v452 = vsel %vm418, %v413, 0.0
            %453 = vadd.xlane.f32.xlu0 %v452
            %v454 = vpop.xlane.xlu0 %453
            %v455 = vsel %vm418, %v414, 0.0
            %456 = vadd.xlane.f32.xlu0 %v455
            %v457 = vpop.xlane.xlu0 %456
            %v458 = vsel %vm418, %v415, 0.0
            %459 = vadd.xlane.f32.xlu0 %v458
            %v460 = vpop.xlane.xlu0 %459
            %v461 = vsel %vm418, %v416, 0.0
            %462 = vadd.xlane.f32.xlu0 %v461
            %v463 = vpop.xlane.xlu0 %462
            %v464 = vsel %vm418, %v417, 0.0
            %465 = vadd.xlane.f32.xlu0 %v464
            %v466 = vpop.xlane.xlu0 %465
            %v467 = vlaneseq
            %v468 = vshrl.u32 %v467, 7
            %v469 = vadd.s32 %v468, 8
            %v470 = vadd.s32 %v468, 16
            %v471 = vadd.s32 %v468, 24
            %v472 = vadd.s32 %v468, 32
            %v473 = vadd.s32 %v468, 40
            %v474 = vadd.s32 %v468, 48
            %v475 = vadd.s32 %v468, 56
            %v476 = vadd.s32 %v468, 64
            %v477 = vadd.s32 %v468, 72
            %v478 = vadd.s32 %v468, 80
            %v479 = vadd.s32 %v468, 88
            %v480 = vadd.s32 %v468, 96
            %v481 = vadd.s32 %v468, 104
            %v482 = vadd.s32 %v468, 112
            %v483 = vadd.s32 %v468, 120
            %vm484 = vcmp.lt.s32.totalorder %v468, 10
            %vm485 = vcmp.lt.s32.totalorder %v469, 10
            %vm486 = vcmp.lt.s32.totalorder %v470, 10
            %vm487 = vcmp.lt.s32.totalorder %v471, 10
            %vm488 = vcmp.lt.s32.totalorder %v472, 10
            %vm489 = vcmp.lt.s32.totalorder %v473, 10
            %vm490 = vcmp.lt.s32.totalorder %v474, 10
            %vm491 = vcmp.lt.s32.totalorder %v475, 10
            %vm492 = vcmp.lt.s32.totalorder %v476, 10
            %vm493 = vcmp.lt.s32.totalorder %v477, 10
            %vm494 = vcmp.lt.s32.totalorder %v478, 10
            %vm495 = vcmp.lt.s32.totalorder %v479, 10
            %vm496 = vcmp.lt.s32.totalorder %v480, 10
            %vm497 = vcmp.lt.s32.totalorder %v481, 10
            %vm498 = vcmp.lt.s32.totalorder %v482, 10
            %vm499 = vcmp.lt.s32.totalorder %v483, 10
            %v500 = vsel %vm484, %v421, 1.0
            %v501 = vsel %vm485, %v424, 1.0
            %v502 = vsel %vm486, %v427, 1.0
            %v503 = vsel %vm487, %v430, 1.0
            %v504 = vsel %vm488, %v433, 1.0
            %v505 = vsel %vm489, %v436, 1.0
            %v506 = vsel %vm490, %v439, 1.0
            %v507 = vsel %vm491, %v442, 1.0
            %v508 = vsel %vm492, %v445, 1.0
            %v509 = vsel %vm493, %v448, 1.0
            %v510 = vsel %vm494, %v451, 1.0
            %v511 = vsel %vm495, %v454, 1.0
            %v512 = vsel %vm496, %v457, 1.0
            %v513 = vsel %vm497, %v460, 1.0
            %v514 = vsel %vm498, %v463, 1.0
            %v515 = vsel %vm499, %v466, 1.0
            %v516 = vrsqrt.pop %v500
            %v517 = vrsqrt.pop %v501
            %v518 = vrsqrt.pop %v502
            %v519 = vrsqrt.pop %v503
            %v520 = vrsqrt.pop %v504
            %v521 = vrsqrt.pop %v505
            %v522 = vrsqrt.pop %v506
            %v523 = vrsqrt.pop %v507
            %v524 = vrsqrt.pop %v508
            %v525 = vrsqrt.pop %v509
            %v526 = vrsqrt.pop %v510
            %v527 = vrsqrt.pop %v511
            %v528 = vrsqrt.pop %v512
            %v529 = vrsqrt.pop %v513
            %v530 = vrsqrt.pop %v514
            %v531 = vrsqrt.pop %v515
            %v532 = vmul.f32 %v386, %v516
            %v533 = vmul.f32 %v387, %v517
            %v534 = vmul.f32 %v388, %v518
            %v535 = vmul.f32 %v389, %v519
            %v536 = vmul.f32 %v390, %v520
            %v537 = vmul.f32 %v391, %v521
            %v538 = vmul.f32 %v392, %v522
            %v539 = vmul.f32 %v393, %v523
            %v540 = vmul.f32 %v394, %v524
            %v541 = vmul.f32 %v395, %v525
            %v542 = vmul.f32 %v396, %v526
            %v543 = vmul.f32 %v397, %v527
            %v544 = vmul.f32 %v398, %v528
            %v545 = vmul.f32 %v399, %v529
            %v546 = vmul.f32 %v400, %v530
            %v547 = vmul.f32 %v401, %v531
            %v549 = vsel %vm418, %v532, 0
            %v552 = vsel %vm418, %v533, 0
            %v555 = vsel %vm418, %v534, 0
            %v558 = vsel %vm418, %v535, 0
            %v561 = vsel %vm418, %v536, 0
            %v564 = vsel %vm418, %v537, 0
            %v567 = vsel %vm418, %v538, 0
            %v570 = vsel %vm418, %v539, 0
            %v573 = vsel %vm418, %v540, 0
            %v576 = vsel %vm418, %v541, 0
            %v579 = vsel %vm418, %v542, 0
            %v582 = vsel %vm418, %v543, 0
            %v585 = vsel %vm418, %v544, 0
            %v588 = vsel %vm418, %v545, 0
            %v591 = vsel %vm418, %v546, 0
            %v594 = vsel %vm418, %v547, 0
            %596 = vmatprep.subr.mxu0 0.0
            %597 = vmatpush1.xpose.msra.mxu0 %v549
            %598 = vmatprep.subr.mxu0 0.0
            %599 = vmatpush1.xpose.msra.mxu0 %v552
            %600 = vmatprep.subr.mxu0 0.0
            %601 = vmatpush1.xpose.msra.mxu0 %v555
            %602 = vmatprep.subr.mxu0 0.0
            %603 = vmatpush1.xpose.msra.mxu0 %v558
            %604 = vmatprep.subr.mxu0 0.0
            %605 = vmatpush1.xpose.msra.mxu0 %v561
            %606 = vmatprep.subr.mxu0 0.0
            %607 = vmatpush1.xpose.msra.mxu0 %v564
            %608 = vmatprep.subr.mxu0 0.0
            %609 = vmatpush1.xpose.msra.mxu0 %v567
            %610 = vmatprep.subr.mxu0 0.0
            %611 = vmatpush1.xpose.msra.mxu0 %v570
            %612 = vmatprep.subr.mxu0 0.0
            %613 = vmatpush1.xpose.msra.mxu0 %v573
            %614 = vmatprep.subr.mxu0 0.0
            %615 = vmatpush1.xpose.msra.mxu0 %v576
            %616 = vmatprep.subr.mxu0 0.0
            %617 = vmatpush1.xpose.msra.mxu0 %v579
            %618 = vmatprep.subr.mxu0 0.0
            %619 = vmatpush1.xpose.msra.mxu0 %v582
            %620 = vmatprep.subr.mxu0 0.0
            %621 = vmatpush1.xpose.msra.mxu0 %v585
            %622 = vmatprep.subr.mxu0 0.0
            %623 = vmatpush1.xpose.msra.mxu0 %v588
            %624 = vmatprep.subr.mxu0 0.0
            %625 = vmatpush1.xpose.msra.mxu0 %v591
            %626 = vmatprep.subr.mxu0 0.0
            %627 = vmatpush1.xpose.msra.mxu0 %v594
            %628 = vmatprep.subr.mxu0 0.0
            %629 = vmatpush1.xpose.msra.mxu0 0.0
            %630 = vmatprep.subr.mxu0 0.0
            %631 = vmatpush1.xpose.msra.mxu0 0.0
            %632 = vmatprep.subr.mxu0 0.0
            %633 = vmatpush1.xpose.msra.mxu0 0.0
            %634 = vmatprep.subr.mxu0 0.0
            %635 = vmatpush1.xpose.msra.mxu0 0.0
            %636 = vmatprep.subr.mxu0 0.0
            %637 = vmatpush1.xpose.msra.mxu0 0.0
            %638 = vmatprep.subr.mxu0 0.0
            %639 = vmatpush1.xpose.msra.mxu0 0.0
            %640 = vmatprep.subr.mxu0 0.0
            %641 = vmatpush1.xpose.msra.mxu0 0.0
            %642 = vmatprep.subr.mxu0 0.0
            %643 = vmatpush1.xpose.msra.mxu0 0.0
            %644 = vmatprep.subr.mxu0 0.0
            %645 = vmatpush1.xpose.msra.mxu0 0.0
            %646 = vmatprep.subr.mxu0 0.0
            %647 = vmatpush1.xpose.msra.mxu0 0.0
            %648 = vmatprep.subr.mxu0 0.0
            %649 = vmatpush1.xpose.msra.mxu0 0.0
            %650 = vmatprep.subr.mxu0 0.0
            %651 = vmatpush1.xpose.msra.mxu0 0.0
            %652 = vmatprep.subr.mxu0 0.0
            %653 = vmatpush1.xpose.msra.mxu0 0.0
            %654 = vmatprep.subr.mxu0 0.0
            %655 = vmatpush1.xpose.msra.mxu0 0.0
            %656 = vmatprep.subr.mxu0 0.0
            %657 = vmatpush1.xpose.msra.mxu0 0.0
            %658 = vmatprep.subr.mxu0 0.0
            %659 = vmatpush1.xpose.msra.mxu0 0.0
            %660 = vmatprep.mubr.f32.mxu0 0.0
            %661 = vmatmul.mubr.f32.gmra.mrb[0].mxu0 %v549
            %v662 = vpop.f32.mrb[0].mxu0
            %v663 = vadd.f32 0.0, %v662
            %v664 = vpop.f32.mrb[0].mxu0
            %665 = vmatprep.mubr.f32.mxu0 0.0
            %666 = vmatmul.mubr.f32.gmra.mrb[0].mxu0 %v552
            %v667 = vpop.f32.mrb[0].mxu0
            %v668 = vadd.f32 0.0, %v667
            %v669 = vpop.f32.mrb[0].mxu0
            %670 = vmatprep.mubr.f32.mxu0 0.0
            %671 = vmatmul.mubr.f32.gmra.mrb[0].mxu0 %v555
            %v672 = vpop.f32.mrb[0].mxu0
            %v673 = vadd.f32 0.0, %v672
            %v674 = vpop.f32.mrb[0].mxu0
            %675 = vmatprep.mubr.f32.mxu0 0.0
            %676 = vmatmul.mubr.f32.gmra.mrb[0].mxu0 %v558
            %v677 = vpop.f32.mrb[0].mxu0
            %v678 = vadd.f32 0.0, %v677
            %v679 = vpop.f32.mrb[0].mxu0
            %680 = vmatprep.mubr.f32.mxu0 0.0
            %681 = vmatmul.mubr.f32.gmra.mrb[0].mxu0 %v561
            %v682 = vpop.f32.mrb[0].mxu0
            %v683 = vadd.f32 0.0, %v682
            %v684 = vpop.f32.mrb[0].mxu0
            %685 = vmatprep.mubr.f32.mxu0 0.0
            %686 = vmatmul.mubr.f32.gmra.mrb[0].mxu0 %v564
            %v687 = vpop.f32.mrb[0].mxu0
            %v688 = vadd.f32 0.0, %v687
            %v689 = vpop.f32.mrb[0].mxu0
            %690 = vmatprep.mubr.f32.mxu0 0.0
            %691 = vmatmul.mubr.f32.gmra.mrb[0].mxu0 %v567
            %v692 = vpop.f32.mrb[0].mxu0
            %v693 = vadd.f32 0.0, %v692
            %v694 = vpop.f32.mrb[0].mxu0
            %695 = vmatprep.mubr.f32.mxu0 0.0
            %696 = vmatmul.mubr.f32.gmra.mrb[0].mxu0 %v570
            %v697 = vpop.f32.mrb[0].mxu0
            %v698 = vadd.f32 0.0, %v697
            %v699 = vpop.f32.mrb[0].mxu0
            %700 = vmatprep.mubr.f32.mxu0 0.0
            %701 = vmatmul.mubr.f32.gmra.mrb[0].mxu0 %v573
            %v702 = vpop.f32.mrb[0].mxu0
            %v703 = vadd.f32 0.0, %v702
            %v704 = vpop.f32.mrb[0].mxu0
            %705 = vmatprep.mubr.f32.mxu0 0.0
            %706 = vmatmul.mubr.f32.gmra.mrb[0].mxu0 %v576
            %v707 = vpop.f32.mrb[0].mxu0
            %v708 = vadd.f32 0.0, %v707
            %v709 = vpop.f32.mrb[0].mxu0
            %710 = vmatprep.mubr.f32.mxu0 0.0
            %711 = vmatmul.mubr.f32.gmra.mrb[0].mxu0 %v579
            %v712 = vpop.f32.mrb[0].mxu0
            %v713 = vadd.f32 0.0, %v712
            %v714 = vpop.f32.mrb[0].mxu0
            %715 = vmatprep.mubr.f32.mxu0 0.0
            %716 = vmatmul.mubr.f32.gmra.mrb[0].mxu0 %v582
            %v717 = vpop.f32.mrb[0].mxu0
            %v718 = vadd.f32 0.0, %v717
            %v719 = vpop.f32.mrb[0].mxu0
            %720 = vmatprep.mubr.f32.mxu0 0.0
            %721 = vmatmul.mubr.f32.gmra.mrb[0].mxu0 %v585
            %v722 = vpop.f32.mrb[0].mxu0
            %v723 = vadd.f32 0.0, %v722
            %v724 = vpop.f32.mrb[0].mxu0
            %725 = vmatprep.mubr.f32.mxu0 0.0
            %726 = vmatmul.mubr.f32.gmra.mrb[0].mxu0 %v588
            %v727 = vpop.f32.mrb[0].mxu0
            %v728 = vadd.f32 0.0, %v727
            %v729 = vpop.f32.mrb[0].mxu0
            %730 = vmatprep.mubr.f32.mxu0 0.0
            %731 = vmatmul.mubr.f32.gmra.mrb[0].mxu0 %v591
            %v732 = vpop.f32.mrb[0].mxu0
            %v733 = vadd.f32 0.0, %v732
            %v734 = vpop.f32.mrb[0].mxu0
            %735 = vmatprep.mubr.f32.mxu0 0.0
            %736 = vmatmul.mubr.f32.gmra.mrb[0].mxu0 %v594
            %v737 = vpop.f32.mrb[0].mxu0
            %v738 = vadd.f32 0.0, %v737
            %v739 = vpop.f32.mrb[0].mxu0
            %740 = vdwg.mxu0
            %v741 = vlaneseq
            %v742 = vand.u32 %v741, 127
            %vm743 = vcmp.ne.s32.totalorder %v468, %v742
            %vm744 = vcmp.ne.s32.totalorder %v469, %v742
            %vm745 = vcmp.ne.s32.totalorder %v470, %v742
            %vm746 = vcmp.ne.s32.totalorder %v471, %v742
            %vm747 = vcmp.ne.s32.totalorder %v472, %v742
            %vm748 = vcmp.ne.s32.totalorder %v473, %v742
            %vm749 = vcmp.ne.s32.totalorder %v474, %v742
            %vm750 = vcmp.ne.s32.totalorder %v475, %v742
            %vm751 = vcmp.ne.s32.totalorder %v476, %v742
            %vm752 = vcmp.ne.s32.totalorder %v477, %v742
            %vm753 = vcmp.ne.s32.totalorder %v478, %v742
            %vm754 = vcmp.ne.s32.totalorder %v479, %v742
            %vm755 = vcmp.ne.s32.totalorder %v480, %v742
            %vm756 = vcmp.ne.s32.totalorder %v481, %v742
            %vm757 = vcmp.ne.s32.totalorder %v482, %v742
            %vm758 = vcmp.ne.s32.totalorder %v483, %v742
            %vm759 = vcmp.lt.s32.totalorder %v742, 10
            %vm760 = vmand %vm484, %vm759
            %vm761 = vmand %vm485, %vm759
            %vm762 = vmand %vm486, %vm759
            %vm763 = vmand %vm487, %vm759
            %vm764 = vmand %vm488, %vm759
            %vm765 = vmand %vm489, %vm759
            %vm766 = vmand %vm490, %vm759
            %vm767 = vmand %vm491, %vm759
            %vm768 = vmand %vm492, %vm759
            %vm769 = vmand %vm493, %vm759
            %vm770 = vmand %vm494, %vm759
            %vm771 = vmand %vm495, %vm759
            %vm772 = vmand %vm496, %vm759
            %vm773 = vmand %vm497, %vm759
            %vm774 = vmand %vm498, %vm759
            %vm775 = vmand %vm499, %vm759
            %vm776 = vmand %vm743, %vm760
            %vm777 = vmand %vm744, %vm761
            %vm778 = vmand %vm745, %vm762
            %vm779 = vmand %vm746, %vm763
            %vm780 = vmand %vm747, %vm764
            %vm781 = vmand %vm748, %vm765
            %vm782 = vmand %vm749, %vm766
            %vm783 = vmand %vm750, %vm767
            %vm784 = vmand %vm751, %vm768
            %vm785 = vmand %vm752, %vm769
            %vm786 = vmand %vm753, %vm770
            %vm787 = vmand %vm754, %vm771
            %vm788 = vmand %vm755, %vm772
            %vm789 = vmand %vm756, %vm773
            %vm790 = vmand %vm757, %vm774
            %vm791 = vmand %vm758, %vm775
            %v792 = vsub.f32 %v663, -0.11111111
            %v793 = vsub.f32 %v668, -0.11111111
            %v794 = vsub.f32 %v673, -0.11111111
            %v795 = vsub.f32 %v678, -0.11111111
            %v796 = vsub.f32 %v683, -0.11111111
            %v797 = vsub.f32 %v688, -0.11111111
            %v798 = vsub.f32 %v693, -0.11111111
            %v799 = vsub.f32 %v698, -0.11111111
            %v800 = vsub.f32 %v703, -0.11111111
            %v801 = vsub.f32 %v708, -0.11111111
            %v802 = vsub.f32 %v713, -0.11111111
            %v803 = vsub.f32 %v718, -0.11111111
            %v804 = vsub.f32 %v723, -0.11111111
            %v805 = vsub.f32 %v728, -0.11111111
            %v806 = vsub.f32 %v733, -0.11111111
            %v807 = vsub.f32 %v738, -0.11111111
            %v808 = vsel %vm776, %v792, 0.0
            %v809 = vsel %vm777, %v793, 0.0
            %v810 = vsel %vm778, %v794, 0.0
            %v811 = vsel %vm779, %v795, 0.0
            %v812 = vsel %vm780, %v796, 0.0
            %v813 = vsel %vm781, %v797, 0.0
            %v814 = vsel %vm782, %v798, 0.0
            %v815 = vsel %vm783, %v799, 0.0
            %v816 = vsel %vm784, %v800, 0.0
            %v817 = vsel %vm785, %v801, 0.0
            %v818 = vsel %vm786, %v802, 0.0
            %v819 = vsel %vm787, %v803, 0.0
            %v820 = vsel %vm788, %v804, 0.0
            %v821 = vsel %vm789, %v805, 0.0
            %v822 = vsel %vm790, %v806, 0.0
            %v823 = vsel %vm791, %v807, 0.0
            %v824 = vmul.f32 %v808, %v808
            %v825 = vmul.f32 %v809, %v809
            %v826 = vmul.f32 %v810, %v810
            %v827 = vmul.f32 %v811, %v811
            %v828 = vmul.f32 %v812, %v812
            %v829 = vmul.f32 %v813, %v813
            %v830 = vmul.f32 %v814, %v814
            %v831 = vmul.f32 %v815, %v815
            %v832 = vmul.f32 %v816, %v816
            %v833 = vmul.f32 %v817, %v817
            %v834 = vmul.f32 %v818, %v818
            %v835 = vmul.f32 %v819, %v819
            %v836 = vmul.f32 %v820, %v820
            %v837 = vmul.f32 %v821, %v821
            %v838 = vmul.f32 %v822, %v822
            %v839 = vmul.f32 %v823, %v823
            %v840 = vadd.f32 %v824, %v825
            %v841 = vadd.f32 %v840, %v826
            %v842 = vadd.f32 %v841, %v827
            %v843 = vadd.f32 %v842, %v828
            %v844 = vadd.f32 %v843, %v829
            %v845 = vadd.f32 %v844, %v830
            %v846 = vadd.f32 %v845, %v831
            %v847 = vadd.f32 %v846, %v832
            %v848 = vadd.f32 %v847, %v833
            %v849 = vadd.f32 %v848, %v834
            %v850 = vadd.f32 %v849, %v835
            %v851 = vadd.f32 %v850, %v836
            %v852 = vadd.f32 %v851, %v837
            %v853 = vadd.f32 %v852, %v838
            %v854 = vadd.f32 %v853, %v839
            %855 = vadd.xlane.f32.xlu0 %v854
            %v856 = vpop.xlane.xlu0 %855
            %v857 = vrot.slane %v856, 4
            %v858 = vadd.f32 %v856, %v857
            %v859 = vrot.slane %v858, 2
            %v860 = vadd.f32 %v858, %v859
            %v861 = vrot.slane %v860, 1
            %v862 = vadd.f32 %v860, %v861
            %s863 = vtos %v862
            %v864 = vstv %s863
            %v865 = vmul.f32 %v864, 0.022222223
            %vm866 = vcmask 0
            %867 = vst.msk [vmem:[#allocation6] sm:$0x1] %vm866, %v865
        $region70: #{tpu_custom_call.1} parent=27 // pred_fallthru
          _
        %v868 = vld [vmem:[%s204] sm:$0xff]
        %v869 = vld [vmem:[%s204 + $0x8] sm:$0xff]
        %v870 = vld [vmem:[%s204 + $0x10] sm:$0xff]
        %v871 = vld [vmem:[%s204 + $0x18] sm:$0xff]
        %v872 = vld [vmem:[%s204 + $0x20] sm:$0xff]
        %v873 = vld [vmem:[%s204 + $0x28] sm:$0xff]
        %v874 = vld [vmem:[%s204 + $0x30] sm:$0xff]
        %v875 = vld [vmem:[%s204 + $0x38] sm:$0xff]
        %v876 = vld [vmem:[%s194] sm:$0xff]
        %v877 = vld [vmem:[%s194 + $0x8] sm:$0xff]
        %v878 = vld [vmem:[%s194 + $0x10] sm:$0xff]
        %v879 = vld [vmem:[%s194 + $0x18] sm:$0xff]
        %v880 = vld [vmem:[%s194 + $0x20] sm:$0xff]
        %v881 = vld [vmem:[%s194 + $0x28] sm:$0xff]
        %v882 = vld [vmem:[%s194 + $0x30] sm:$0xff]
        %v883 = vld [vmem:[%s194 + $0x38] sm:$0xff]
        %v884 = vld [vmem:[#allocation2] sm:$0xff]
        %v885 = vld [vmem:[#allocation2 + $0x8] sm:$0xff]
        %v886 = vld [vmem:[#allocation2 + $0x10] sm:$0xff]
        %v887 = vld [vmem:[#allocation2 + $0x18] sm:$0xff]
        %v888 = vld [vmem:[#allocation2 + $0x20] sm:$0xff]
        %v889 = vld [vmem:[#allocation2 + $0x28] sm:$0xff]
        %v890 = vld [vmem:[#allocation2 + $0x30] sm:$0xff]
        %v891 = vld [vmem:[#allocation2 + $0x38] sm:$0xff]
        %vm892 = vcmask 523264
        %v894 = vsel %vm892, %v868, 0
        %v897 = vsel %vm892, %v869, 0
        %v900 = vsel %vm892, %v870, 0
        %v903 = vsel %vm892, %v871, 0
        %v906 = vsel %vm892, %v872, 0
        %v909 = vsel %vm892, %v873, 0
        %v912 = vsel %vm892, %v874, 0
        %v915 = vsel %vm892, %v875, 0
        %917 = vmatprep.subr.mxu0 0.0
        %918 = vmatpush1.msra.mxu0 %v884
        %919 = vmatprep.subr.mxu0 0.0
        %920 = vmatpush1.msra.mxu0 %v885
        %921 = vmatprep.subr.mxu0 0.0
        %922 = vmatpush1.msra.mxu0 %v886
        %923 = vmatprep.subr.mxu0 0.0
        %924 = vmatpush1.msra.mxu0 %v887
        %925 = vmatprep.subr.mxu0 0.0
        %926 = vmatpush1.msra.mxu0 %v888
        %927 = vmatprep.subr.mxu0 0.0
        %928 = vmatpush1.msra.mxu0 %v889
        %929 = vmatprep.subr.mxu0 0.0
        %930 = vmatpush1.msra.mxu0 %v890
        %931 = vmatprep.subr.mxu0 0.0
        %932 = vmatpush1.msra.mxu0 %v891
        %933 = vmatprep.subr.mxu0 0.0
        %934 = vmatpush1.msra.mxu0 0.0
        %935 = vmatprep.subr.mxu0 0.0
        %936 = vmatpush1.msra.mxu0 0.0
        %937 = vmatprep.subr.mxu0 0.0
        %938 = vmatpush1.msra.mxu0 0.0
        %939 = vmatprep.subr.mxu0 0.0
        %940 = vmatpush1.msra.mxu0 0.0
        %941 = vmatprep.subr.mxu0 0.0
        %942 = vmatpush1.msra.mxu0 0.0
        %943 = vmatprep.subr.mxu0 0.0
        %944 = vmatpush1.msra.mxu0 0.0
        %945 = vmatprep.subr.mxu0 0.0
        %946 = vmatpush1.msra.mxu0 0.0
        %947 = vmatprep.subr.mxu0 0.0
        %948 = vmatpush1.msra.mxu0 0.0
        %949 = vmatprep.subr.mxu0 0.0
        %950 = vmatpush1.msra.mxu0 0.0
        %951 = vmatprep.subr.mxu0 0.0
        %952 = vmatpush1.msra.mxu0 0.0
        %953 = vmatprep.subr.mxu0 0.0
        %954 = vmatpush1.msra.mxu0 0.0
        %955 = vmatprep.subr.mxu0 0.0
        %956 = vmatpush1.msra.mxu0 0.0
        %957 = vmatprep.subr.mxu0 0.0
        %958 = vmatpush1.msra.mxu0 0.0
        %959 = vmatprep.subr.mxu0 0.0
        %960 = vmatpush1.msra.mxu0 0.0
        %961 = vmatprep.subr.mxu0 0.0
        %962 = vmatpush1.msra.mxu0 0.0
        %963 = vmatprep.subr.mxu0 0.0
        %964 = vmatpush1.msra.mxu0 0.0
        %965 = vmatprep.subr.mxu0 0.0
        %966 = vmatpush1.msra.mxu0 0.0
        %967 = vmatprep.subr.mxu0 0.0
        %968 = vmatpush1.msra.mxu0 0.0
        %969 = vmatprep.subr.mxu0 0.0
        %970 = vmatpush1.msra.mxu0 0.0
        %971 = vmatprep.subr.mxu0 0.0
        %972 = vmatpush1.msra.mxu0 0.0
        %973 = vmatprep.subr.mxu0 0.0
        %974 = vmatpush1.msra.mxu0 0.0
        %975 = vmatprep.subr.mxu0 0.0
        %976 = vmatpush1.msra.mxu0 0.0
        %977 = vmatprep.subr.mxu0 0.0
        %978 = vmatpush1.msra.mxu0 0.0
        %979 = vmatprep.subr.mxu0 0.0
        %980 = vmatpush1.msra.mxu0 0.0
        %981 = vmatprep.mubr.f32.mxu0 0.0
        %982 = vmatmul.mubr.f32.gmra.mrb[0].mxu0 %v894
        %v983 = vpop.f32.mrb[0].mxu0
        %v984 = vadd.f32 0.0, %v983
        %v985 = vpop.f32.mrb[0].mxu0
        %986 = vmatprep.mubr.f32.mxu0 0.0
        %987 = vmatmul.mubr.f32.gmra.mrb[0].mxu0 %v897
        %v988 = vpop.f32.mrb[0].mxu0
        %v989 = vadd.f32 0.0, %v988
        %v990 = vpop.f32.mrb[0].mxu0
        %991 = vmatprep.mubr.f32.mxu0 0.0
        %992 = vmatmul.mubr.f32.gmra.mrb[0].mxu0 %v900
        %v993 = vpop.f32.mrb[0].mxu0
        %v994 = vadd.f32 0.0, %v993
        %v995 = vpop.f32.mrb[0].mxu0
        %996 = vmatprep.mubr.f32.mxu0 0.0
        %997 = vmatmul.mubr.f32.gmra.mrb[0].mxu0 %v903
        %v998 = vpop.f32.mrb[0].mxu0
        %v999 = vadd.f32 0.0, %v998
        %v1000 = vpop.f32.mrb[0].mxu0
        %1001 = vmatprep.mubr.f32.mxu0 0.0
        %1002 = vmatmul.mubr.f32.gmra.mrb[0].mxu0 %v906
        %v1003 = vpop.f32.mrb[0].mxu0
        %v1004 = vadd.f32 0.0, %v1003
        %v1005 = vpop.f32.mrb[0].mxu0
        %1006 = vmatprep.mubr.f32.mxu0 0.0
        %1007 = vmatmul.mubr.f32.gmra.mrb[0].mxu0 %v909
        %v1008 = vpop.f32.mrb[0].mxu0
        %v1009 = vadd.f32 0.0, %v1008
        %v1010 = vpop.f32.mrb[0].mxu0
        %1011 = vmatprep.mubr.f32.mxu0 0.0
        %1012 = vmatmul.mubr.f32.gmra.mrb[0].mxu0 %v912
        %v1013 = vpop.f32.mrb[0].mxu0
        %v1014 = vadd.f32 0.0, %v1013
        %v1015 = vpop.f32.mrb[0].mxu0
        %1016 = vmatprep.mubr.f32.mxu0 0.0
        %1017 = vmatmul.mubr.f32.gmra.mrb[0].mxu0 %v915
        %v1018 = vpop.f32.mrb[0].mxu0
        %v1019 = vadd.f32 0.0, %v1018
        %v1020 = vpop.f32.mrb[0].mxu0
        %1021 = vdwg.mxu0
        %v1022 = vlaneseq
        %v1023 = vand.u32 %v1022, 127
        %1024 = vset.pattern.permute.xlu0 0
        %1025 = vperm.xlu0 %1024, %v876
        %v1026 = vpop.permute.xlu0 %1025
        %1027 = vset.pattern.permute.xlu0 0
        %1028 = vperm.xlu0 %1027, %v877
        %v1029 = vpop.permute.xlu0 %1028
        %1030 = vset.pattern.permute.xlu0 0
        %1031 = vperm.xlu0 %1030, %v878
        %v1032 = vpop.permute.xlu0 %1031
        %1033 = vset.pattern.permute.xlu0 0
        %1034 = vperm.xlu0 %1033, %v879
        %v1035 = vpop.permute.xlu0 %1034
        %1036 = vset.pattern.permute.xlu0 0
        %1037 = vperm.xlu0 %1036, %v880
        %v1038 = vpop.permute.xlu0 %1037
        %1039 = vset.pattern.permute.xlu0 0
        %1040 = vperm.xlu0 %1039, %v881
        %v1041 = vpop.permute.xlu0 %1040
        %1042 = vset.pattern.permute.xlu0 0
        %1043 = vperm.xlu0 %1042, %v882
        %v1044 = vpop.permute.xlu0 %1043
        %1045 = vset.pattern.permute.xlu0 0
        %1046 = vperm.xlu0 %1045, %v883
        %v1047 = vpop.permute.xlu0 %1046
        %vm1048 = vcmp.eq.s32.totalorder %v1023, %v1026
        %vm1049 = vcmp.eq.s32.totalorder %v1023, %v1029
        %vm1050 = vcmp.eq.s32.totalorder %v1023, %v1032
        %vm1051 = vcmp.eq.s32.totalorder %v1023, %v1035
        %vm1052 = vcmp.eq.s32.totalorder %v1023, %v1038
        %vm1053 = vcmp.eq.s32.totalorder %v1023, %v1041
        %vm1054 = vcmp.eq.s32.totalorder %v1023, %v1044
        %vm1055 = vcmp.eq.s32.totalorder %v1023, %v1047
        %v1056 = vld [vmem:[#allocation7] sm:$0x1]
        %v1057 = vmul.f32 %v984, 2.0
        %v1058 = vmul.f32 %v989, 2.0
        %v1059 = vmul.f32 %v994, 2.0
        %v1060 = vmul.f32 %v999, 2.0
        %v1061 = vmul.f32 %v1004, 2.0
        %v1062 = vmul.f32 %v1009, 2.0
        %v1063 = vmul.f32 %v1014, 2.0
        %v1064 = vmul.f32 %v1019, 2.0
        %v1066 = vlaneseq
        %v1067 = vshrl.u32 %v1066, 7
        %v1068 = vsub.s32 0, %v1067
        %v1069 = vrot.slane %v1056, %v1068
        %v1071 = vsub.f32 %v1069, %v1057
        %v1072 = vsub.f32 %v1069, %v1058
        %v1073 = vsub.f32 %v1069, %v1059
        %v1074 = vsub.f32 %v1069, %v1060
        %v1075 = vsub.f32 %v1069, %v1061
        %v1076 = vsub.f32 %v1069, %v1062
        %v1077 = vsub.f32 %v1069, %v1063
        %v1078 = vsub.f32 %v1069, %v1064
        %v1079 = vsel %vm1048, %v1071, 0.0
        %v1080 = vsel %vm1049, %v1072, 0.0
        %v1081 = vsel %vm1050, %v1073, 0.0
        %v1082 = vsel %vm1051, %v1074, 0.0
        %v1083 = vsel %vm1052, %v1075, 0.0
        %v1084 = vsel %vm1053, %v1076, 0.0
        %v1085 = vsel %vm1054, %v1077, 0.0
        %v1086 = vsel %vm1055, %v1078, 0.0
        %v1087 = vld [vmem:[#allocation4] sm:$0x1]
        %v1088 = vadd.f32 %v1079, %v1080
        %v1089 = vadd.f32 %v1088, %v1081
        %v1090 = vadd.f32 %v1089, %v1082
        %v1091 = vadd.f32 %v1090, %v1083
        %v1092 = vadd.f32 %v1091, %v1084
        %v1093 = vadd.f32 %v1092, %v1085
        %v1094 = vadd.f32 %v1093, %v1086
        %v1095 = vrot.slane %v1094, 4
        %v1096 = vadd.f32 %v1094, %v1095
        %v1097 = vrot.slane %v1096, 2
        %v1098 = vadd.f32 %v1096, %v1097
        %v1099 = vrot.slane %v1098, 1
        %v1100 = vadd.f32 %v1098, %v1099
        %v1101 = vadd.f32 %v1087, %v1100
        %1102 = vst [vmem:[#allocation4] sm:$0x1] %v1101
        %v1103 = vld [vmem:[#allocation5] sm:$0x1]
        %v1104 = vmul.f32 %v868, %v868
        %v1105 = vmul.f32 %v869, %v869
        %v1106 = vmul.f32 %v870, %v870
        %v1107 = vmul.f32 %v871, %v871
        %v1108 = vmul.f32 %v872, %v872
        %v1109 = vmul.f32 %v873, %v873
        %v1110 = vmul.f32 %v874, %v874
        %v1111 = vmul.f32 %v875, %v875
        %v1112 = vsel %vm892, %v1104, 0.0
        %v1113 = vsel %vm892, %v1105, 0.0
        %v1114 = vadd.f32 %v1112, %v1113
        %v1115 = vsel %vm892, %v1106, 0.0
        %v1116 = vadd.f32 %v1114, %v1115
        %v1117 = vsel %vm892, %v1107, 0.0
        %v1118 = vadd.f32 %v1116, %v1117
        %v1119 = vsel %vm892, %v1108, 0.0
        %v1120 = vadd.f32 %v1118, %v1119
        %v1121 = vsel %vm892, %v1109, 0.0
        %v1122 = vadd.f32 %v1120, %v1121
        %v1123 = vsel %vm892, %v1110, 0.0
        %v1124 = vadd.f32 %v1122, %v1123
        %v1125 = vsel %vm892, %v1111, 0.0
        %v1126 = vadd.f32 %v1124, %v1125
        %v1127 = vrot.slane %v1126, 4
        %v1128 = vadd.f32 %v1126, %v1127
        %v1129 = vrot.slane %v1128, 2
        %v1130 = vadd.f32 %v1128, %v1129
        %v1131 = vrot.slane %v1130, 1
        %v1132 = vadd.f32 %v1130, %v1131
        %v1133 = vadd.f32 %v1103, %v1132
        %vm1134 = vcmask 516096
        %1135 = vst.msk [vmem:[#allocation5] sm:$0x1] %vm1134, %v1133
        %p1136 = scmp.eq.s32.totalorder %s23, 1
        // Predicated region
        $region106: #{tpu_custom_call.1} parent=27 // pred_check
          %p1137 = pneg %p1136
        $region107: #{tpu_custom_call.1} parent=27 // pred_check_branch
          %1139 = sbr.rel (%p1137) target = $region109
        $region108: #{tpu_custom_call.1} parent=27 // pred_region
          %v1140 = vld [vmem:[#allocation5] sm:$0x1]
          %v1141 = vsel %vm1134, %v1140, 0.0
          %1142 = vadd.xlane.f32.xlu0 %v1141
          %v1143 = vpop.xlane.xlu0 %1142
          %v1144 = vrot.slane %v1143, 4
          %v1145 = vadd.f32 %v1143, %v1144
          %v1146 = vrot.slane %v1145, 2
          %v1147 = vadd.f32 %v1145, %v1146
          %v1148 = vrot.slane %v1147, 1
          %v1149 = vadd.f32 %v1147, %v1148
          %s1150 = vtos %v1149
          %v1151 = vstv %s1150
          %v1152 = vld [vmem:[#allocation4] sm:$0x1]
          %vm1153 = vcmask 1040384
          %v1154 = vsel %vm1153, %v1152, 0.0
          %1155 = vadd.xlane.f32.xlu0 %v1154
          %v1156 = vpop.xlane.xlu0 %1155
          %v1157 = vrot.slane %v1156, 4
          %v1158 = vadd.f32 %v1156, %v1157
          %v1159 = vrot.slane %v1158, 2
          %v1160 = vadd.f32 %v1158, %v1159
          %v1161 = vrot.slane %v1160, 1
          %v1162 = vadd.f32 %v1160, %v1161
          %s1163 = vtos %v1162
          %v1164 = vstv %s1163
          %v1165 = vadd.f32 %v1151, %v1164
          %v1166 = vmul.f32 %v1165, 0.0025
          %v1167 = vld [vmem:[#allocation6] sm:$0x1]
          %v1168 = vadd.f32 %v1166, %v1167
          %v1169 = vlaneseq
          %v1170 = vshrl.u32 %v1169, 7
          %vm1171 = vcmp.eq.s32.totalorder %v1170, 0
          %vm1172 = vcmp.eq.s32.totalorder %v1023, 0
          %vm1173 = vmand %vm1171, %vm1172
          %v1175 = vlaneseq
          %v1176 = vshrl.u32 %v1175, 7
          %v1177 = vsub.s32 0, %v1176
          %v1178 = vrot.slane %v1168, %v1177
          %1179 = vset.pattern.permute.xlu0 0
          %1180 = vperm.xlu0 %1179, %v1178
          %v1181 = vpop.permute.xlu0 %1180
          %v1183 = vsel %vm1173, %v1181, 0.0
          %1184 = vst [vmem:[%s187] sm:$0xff] %v1183
        $region109: #{tpu_custom_call.1} parent=27 // pred_fallthru
          _
        %s1185 = sand.u32 %s98, 1
        %s1186 = scalar_lea.sflag [#allocation9], %s1185
        %s1187 = sand.u32 %s98, 1
        %s1188 = smul.addr %s1187, 8
        %s1189 = scalar_lea.vmem [#allocation8], %s1188
        // Predicated region
        $region110: #{tpu_custom_call.1} parent=27 // pred_check
          %p1190 = pneg %p108
        $region111: #{tpu_custom_call.1} parent=27 // pred_check_branch
          %1192 = sbr.rel (%p1190) target = $region113
        $region112: #{tpu_custom_call.1} parent=27 // pred_region
          %s1194 = ssub.s32 128, 128
          %1195 = vsyncadd %s1186, %s1194
          %s1196 = smul.addr %s22, 128
          %s1197 = scalar_lea.hbm %s4, %s1196
          %s1199 = sshll.u32 %s1189, 4
          %s1200 = int_to_ptr.vmem [resolvable:$true] %s1199
          %1202 = dma.vmem_to_hbm [thread:$0]  %s1200, 128, %s1197, %s1186
        $region113: #{tpu_custom_call.1} parent=27 // pred_fallthru
          _
      $region28: #{tpu_custom_call.1} parent=5 // pred_fallthru
        _
      %p1203 = scmp.le.s32.totalorder 2, %s13
      // Predicated region
      $region114: #{tpu_custom_call.1} parent=5 // pred_check
        %p1204 = pneg %p1203
      $region115: #{tpu_custom_call.1} parent=5 // pred_check_branch
        %1206 = sbr.rel (%p1204) target = $region117
      $region116: #{tpu_custom_call.1} parent=5 // pred_region
        %s1207 = ssub.s32 %s13, 2
        // Predicated region
        $region118: #{tpu_custom_call.1} parent=116 // pred_check
          %p1208 = pneg %p114
        $region119: #{tpu_custom_call.1} parent=116 // pred_check_branch
          %1210 = sbr.rel (%p1208) target = $region121
        $region120: #{tpu_custom_call.1} parent=116 // pred_region
          %s1211 = sand.u32 %s99, 1
          %s1212 = scalar_lea.sflag [#allocation9], %s1211
          %s1213 = sand.u32 %s99, 1
          %s1214 = smul.addr %s1213, 8
          %s1215 = scalar_lea.vmem [#allocation8], %s1214
          %1216 = dma.done %s1212, 128
        $region121: #{tpu_custom_call.1} parent=116 // pred_fallthru
          _
      $region117: #{tpu_custom_call.1} parent=5 // pred_fallthru
        _
    $region6: #{tpu_custom_call.1} parent=1 // loop_footer
      %s17 = sadd.s32 1, %s13
    $region7: #{tpu_custom_call.1} parent=1 // loop_footer_branch
      %12 = sbr.rel target = $region3
    $region8: #{tpu_custom_call.1} parent=1 // loop_exit
      _
    %1217 = vsyncpa [#allocation9], 1
    %s1218 = scalar_lea.sflag [#allocation9], 1
    %1219 = vsyncpa %s1218, 1
  %1220 = vsyncmov [#allocation3]
  %s1221 = vpop.sfrf %1220
  %p1222 = scmp.eq.s32.totalorder %s1221, 0
  %p1223 = pneg %p1222
  %1225 = shalt.err (%p1223)

</llo_original>
